<compile_context>
chip_gen: v6e
topology: v6e:2x2x1
jax: 0.10.0
libtpu: 0.0.40
codegen_flags: <defaults>
</compile_context>

<pallas_src>
import functools
from math import sqrt

import jax
import jax.numpy as jnp
import numpy as np
from jax.experimental import pallas as pl
from jax.experimental.pallas import tpu as pltpu


def _round_up(x, m):
    return (x + m - 1) // m * m


def _pick_row_tile(H, pad, W, cin_p, cout_p, K, itemsize, budget=20 << 20):
    """Largest divisor of H that is a multiple of 2*pad and fits the VMEM budget."""
    step = max(2 * pad, 1)

    def vmem_est(t):
        rows = t + 2 * pad
        wp = W + 2 * pad
        return (2 * rows * wp * cin_p * itemsize        # double-buffered x (+halo)
                + 2 * t * W * cout_p * itemsize          # double-buffered out
                + t * W * K * K * cin_p * 4              # im2col patches
                + rows * wp * cin_p * 4                  # modulated slab (f32)
                + K * K * cin_p * cout_p * itemsize)     # folded weights

    candidates = [t for t in range(step, H + 1, step) if H % t == 0]
    if H not in candidates:
        candidates.append(H)                             # whole-image fallback
    within = [t for t in candidates if vmem_est(t) <= budget]
    return max(within) if within else min(candidates)


def _conv_mod_kernel(*refs, T, W, K, has_halo, apply_demod):
    # refs (in order):
    #   s_ref    : (1, 1, Cin_p)            per-batch style scales (f32)
    #   [d_ref]  : (1, 1, Cout_p)           per-batch demod scales (only if apply_demod)
    #   x_ref    : (1, T, Wp, Cin_p)        main row block
    #              (or (1, H+2*pad, Wp, Cin_p) when there is no halo split)
    #   [halo]   : (1, 2*pad, Wp, Cin_p)    rows just below the block (only if has_halo)
    #   w_ref    : (K*K*Cin_p, Cout_p)      folded, UN-modulated equalized weights
    #   o_ref    : (1, T, W, Cout_p)
    refs = list(refs)
    s_ref = refs.pop(0)
    d_ref = refs.pop(0) if apply_demod else None
    x_ref = refs.pop(0)
    halo_ref = refs.pop(0) if has_halo else None
    w_ref, o_ref = refs

    s = s_ref[0, 0].astype(jnp.float32)                       # (Cin_p,)

    xb = x_ref[0]
    if has_halo:
        xb = jnp.concatenate([xb, halo_ref[0]], axis=0)       # (T+2*pad, Wp, Cin_p)

    # Modulate activations (cheap VPU, f32) instead of materializing modulated weights.
    mm_dtype = w_ref.dtype
    slab = (xb.astype(jnp.float32) * s[None, None, :]).astype(mm_dtype)
    cin_p = slab.shape[-1]

    # im2col: K*K shifted row-slab views concatenated on the lane axis, so the whole
    # conv for this tile is a single deep MXU contraction.  Slices are static.
    cols = []
    for kh in range(K):
        row_slab = slab[kh:kh + T]                             # outer-dim (row) slice
        for kw in range(K):
            piece = row_slab[:, kw:kw + W, :]                  # (T, W, Cin_p)
            cols.append(piece.reshape(T * W, cin_p))
    patches = jnp.concatenate(cols, axis=1)                    # (T*W, K*K*Cin_p)

    acc = jnp.dot(patches, w_ref[...], preferred_element_type=jnp.float32)
    if apply_demod:
        d = d_ref[0, 0].astype(jnp.float32)                    # (Cout_p,)
        acc = acc * d[None, :]                                 # per-Cout demodulation
    o_ref[0] = acc.reshape(T, W, -1).astype(o_ref.dtype)       # lane-dense store


@functools.partial(jax.jit, static_argnames=("demodulate", "eps", "row_tile"))
def conv2d_weight_modulate(x_nchw, s, weight_oihw, *, demodulate=True,
                           eps=1e-8, row_tile=None):
    """x_nchw: (B, Cin, H, W), s: (B, Cin), weight_oihw: (Cout, Cin, K, K)."""
    B, Cin, H, W = x_nchw.shape
    Cout, Cin_w, K, K2 = weight_oihw.shape
    assert Cin == Cin_w and K == K2 and K % 2 == 1
    pad = (K - 1) // 2

    cin_p = _round_up(Cin, 128)       # lane-dense channel axes
    cout_p = _round_up(Cout, 128)

    out_dtype = x_nchw.dtype
    mm_dtype = jnp.bfloat16 if out_dtype == jnp.bfloat16 else jnp.float32
    itemsize = jnp.dtype(mm_dtype).itemsize

    # Row tiling (VMEM-aware).
    if row_tile is None:
        T = _pick_row_tile(H, pad, W, cin_p, cout_p, K, itemsize)
    else:
        T = int(row_tile)
    assert H % T == 0
    assert pad == 0 or T == H or T % (2 * pad) == 0
    n_rt = H // T
    has_halo = (pad > 0) and (n_rt > 1)
    x_block_h = T if (has_halo or pad == 0) else H + 2 * pad

    # EqualizedWeight scale; fold taps -> (K*K*Cin_p, Cout_p), batch-invariant.
    c = 1.0 / sqrt(Cin * K * K)
    w = jnp.transpose(weight_oihw.astype(jnp.float32), (2, 3, 1, 0)) * c    # (K,K,Cin,Cout)
    w = jnp.pad(w, ((0, 0), (0, 0), (0, cin_p - Cin), (0, cout_p - Cout)))
    w_folded = w.reshape(K * K * cin_p, cout_p).astype(mm_dtype)

    # Per-batch style / demod scales (tiny, computed once in the wrapper).
    s_p = jnp.pad(s.astype(jnp.float32), ((0, 0), (0, cin_p - Cin)))        # (B, Cin_p)
    s3 = s_p.reshape(B, 1, cin_p)
    if demodulate:
        wsq = jnp.sum(w * w, axis=(0, 1))                                   # (Cin_p, Cout_p)
        d = jax.lax.rsqrt((s_p * s_p) @ wsq + eps)                          # (B, Cout_p)
        d3 = d.reshape(B, 1, cout_p)

    # NCHW -> NHWC + spatial halo pad + channel pad to lane width (fused under jit).
    x_nhwc = jnp.transpose(x_nchw, (0, 2, 3, 1))
    x_pad = jnp.pad(x_nhwc, ((0, 0), (pad, pad), (pad, pad), (0, cin_p - Cin))
                    ).astype(mm_dtype)
    Wp = W + 2 * pad

    kernel = functools.partial(_conv_mod_kernel, T=T, W=W, K=K,
                               has_halo=has_halo, apply_demod=demodulate)

    in_specs = [pl.BlockSpec((1, 1, cin_p), lambda b, rt: (b, 0, 0))]
    operands = [s3]
    if demodulate:
        in_specs.append(pl.BlockSpec((1, 1, cout_p), lambda b, rt: (b, 0, 0)))
        operands.append(d3)
    in_specs.append(pl.BlockSpec((1, x_block_h, Wp, cin_p), lambda b, rt: (b, rt, 0, 0)))
    operands.append(x_pad)
    if has_halo:
        ratio = T // (2 * pad)
        in_specs.append(
            pl.BlockSpec((1, 2 * pad, Wp, cin_p),
                         lambda b, rt: (b, (rt + 1) * ratio, 0, 0)))
        operands.append(x_pad)       # second (halo) view of the same padded input
    in_specs.append(pl.BlockSpec((K * K * cin_p, cout_p), lambda b, rt: (0, 0)))
    operands.append(w_folded)

    out_nhwc = pl.pallas_call(
        kernel,
        out_shape=jax.ShapeDtypeStruct((B, H, W, cout_p), out_dtype),
        grid=(B, n_rt),
        in_specs=in_specs,
        out_specs=pl.BlockSpec((1, T, W, cout_p), lambda b, rt: (b, rt, 0, 0)),
        compiler_params=pltpu.CompilerParams(
            dimension_semantics=("parallel", "parallel"),
            vmem_limit_bytes=48 * 1024 * 1024),
    )(*operands)

    out = out_nhwc[..., :Cout]
    return jnp.transpose(out, (0, 3, 1, 2))                    # NHWC -> NCHW


def ref_conv2d_weight_modulate(x, s, weight, demodulate=True, eps=1e-8):
    """Pure-JAX reference matching the PyTorch forward exactly."""
    B, Cin, H, W = x.shape
    Cout, _, K, _ = weight.shape
    pad = (K - 1) // 2
    c = 1.0 / sqrt(Cin * K * K)
    wts = (weight * c)[None, :, :, :, :] * s[:, None, :, None, None]
    if demodulate:
        sigma_inv = jax.lax.rsqrt(
            jnp.sum(wts ** 2, axis=(2, 3, 4), keepdims=True) + eps)
        wts = wts * sigma_inv
    outs = []
    for i in range(B):  # grouped conv, one group per batch element
        o = jax.lax.conv_general_dilated(
            x[i:i + 1], wts[i], window_strides=(1, 1),
            padding=[(pad, pad), (pad, pad)],
            dimension_numbers=("NCHW", "OIHW", "NCHW"))
        outs.append(o)
    return jnp.concatenate(outs, axis=0)


if __name__ == "__main__":
    B, Cin, Cout, K, H, W = 2, 4, 4, 3, 16, 16

    key = jax.random.PRNGKey(0)
    kx, ks, kw = jax.random.split(key, 3)
    x = jax.random.normal(kx, (B, Cin, H, W), dtype=jnp.float32)
    s = jax.random.normal(ks, (B, Cin), dtype=jnp.float32)
    weight = jax.random.normal(kw, (Cout, Cin, K, K), dtype=jnp.float32)

    # Row-tiled path (exercises the halo BlockSpec).
    out = conv2d_weight_modulate(x, s, weight, demodulate=True, eps=1e-8, row_tile=8)
    out = jax.block_until_ready(out)
    ref = ref_conv2d_weight_modulate(x, s, weight, demodulate=True, eps=1e-8)
    ref = jax.block_until_ready(ref)
    assert out.shape == (B, Cout, H, W), out.shape
    np.testing.assert_allclose(np.asarray(out), np.asarray(ref), rtol=1e-4, atol=1e-4)

    # Auto-tiled / demodulate=False path (ToRGB-style usage).
    out2 = jax.block_until_ready(conv2d_weight_modulate(x, s, weight, demodulate=False))
    ref2 = jax.block_until_ready(ref_conv2d_weight_modulate(x, s, weight, demodulate=False))
    np.testing.assert_allclose(np.asarray(out2), np.asarray(ref2), rtol=1e-4, atol=1e-4)

    print("KERNEL_OK")
</pallas_src>

<mosaic_0001>
module attributes {stable_mosaic.version = 11 : i64} {
  func.func @_conv_mod_kernel(%arg0: i32, %arg1: i32, %arg2: memref<1x1x128xf32, #tpu.memory_space<vmem>>, %arg3: memref<1x1x128xf32, #tpu.memory_space<vmem>>, %arg4: memref<1x8x18x128xf32, #tpu.memory_space<vmem>>, %arg5: memref<1x2x18x128xf32, #tpu.memory_space<vmem>>, %arg6: memref<1152x128xf32, #tpu.memory_space<vmem>>, %arg7: memref<1x8x16x128xf32, #tpu.memory_space<vmem>>) attributes {dimension_semantics = [#tpu.dimension_semantics<parallel>, #tpu.dimension_semantics<parallel>], iteration_bounds = array<i64: 2, 2>, scalar_prefetch = 0 : i64, scratch_operands = 0 : i64, tpu.core_type = #tpu.core_type<tc>, window_params = [{transform_indices = @transform_0, window_bounds = array<i64: 1, 1, 128>}, {transform_indices = @transform_1, window_bounds = array<i64: 1, 1, 128>}, {transform_indices = @transform_2, window_bounds = array<i64: 1, 8, 18, 128>}, {transform_indices = @transform_3, window_bounds = array<i64: 1, 2, 18, 128>}, {pipeline_mode = #tpu.pipeline_mode<synchronous>, transform_indices = @transform_4, window_bounds = array<i64: 1152, 128>}, {transform_indices = @transform_5, window_bounds = array<i64: 1, 8, 16, 128>}]} {
    %c0 = arith.constant 0 : index
    %c0_0 = arith.constant 0 : index
    %c0_1 = arith.constant 0 : index
    %0 = vector.load %arg2[%c0, %c0_0, %c0_1] : memref<1x1x128xf32, #tpu.memory_space<vmem>>, vector<1x1x128xf32>
    %1 = vector.shape_cast %0 : vector<1x1x128xf32> to vector<128xf32>
    %c0_2 = arith.constant 0 : index
    %c0_3 = arith.constant 0 : index
    %c0_4 = arith.constant 0 : index
    %c0_5 = arith.constant 0 : index
    %2 = vector.load %arg4[%c0_2, %c0_3, %c0_4, %c0_5] : memref<1x8x18x128xf32, #tpu.memory_space<vmem>>, vector<1x8x18x128xf32>
    %3 = vector.shape_cast %2 : vector<1x8x18x128xf32> to vector<8x18x128xf32>
    %c0_6 = arith.constant 0 : index
    %c0_7 = arith.constant 0 : index
    %c0_8 = arith.constant 0 : index
    %c0_9 = arith.constant 0 : index
    %4 = vector.load %arg5[%c0_6, %c0_7, %c0_8, %c0_9] : memref<1x2x18x128xf32, #tpu.memory_space<vmem>>, vector<1x2x18x128xf32>
    %5 = vector.shape_cast %4 : vector<1x2x18x128xf32> to vector<2x18x128xf32>
    %6 = tpu.concatenate %3, %5 in 0 : vector<8x18x128xf32>, vector<2x18x128xf32> -> vector<10x18x128xf32>
    %7 = vector.shape_cast %1 : vector<128xf32> to vector<1x1x128xf32>
    %8 = vector.broadcast %7 : vector<1x1x128xf32> to vector<10x18x128xf32>
    %9 = arith.mulf %6, %8 : vector<10x18x128xf32>
    %10 = vector.extract_strided_slice %9 {offsets = [0, 0, 0], sizes = [8, 18, 128], strides = [1, 1, 1]} : vector<10x18x128xf32> to vector<8x18x128xf32>
    %11 = vector.extract_strided_slice %10 {offsets = [0, 0, 0], sizes = [8, 16, 128], strides = [1, 1, 1]} : vector<8x18x128xf32> to vector<8x16x128xf32>
    %12 = vector.shape_cast %11 : vector<8x16x128xf32> to vector<128x128xf32>
    %13 = vector.extract_strided_slice %10 {offsets = [0, 1, 0], sizes = [8, 16, 128], strides = [1, 1, 1]} : vector<8x18x128xf32> to vector<8x16x128xf32>
    %14 = vector.shape_cast %13 : vector<8x16x128xf32> to vector<128x128xf32>
    %15 = vector.extract_strided_slice %10 {offsets = [0, 2, 0], sizes = [8, 16, 128], strides = [1, 1, 1]} : vector<8x18x128xf32> to vector<8x16x128xf32>
    %16 = vector.shape_cast %15 : vector<8x16x128xf32> to vector<128x128xf32>
    %17 = vector.extract_strided_slice %9 {offsets = [1, 0, 0], sizes = [8, 18, 128], strides = [1, 1, 1]} : vector<10x18x128xf32> to vector<8x18x128xf32>
    %18 = vector.extract_strided_slice %17 {offsets = [0, 0, 0], sizes = [8, 16, 128], strides = [1, 1, 1]} : vector<8x18x128xf32> to vector<8x16x128xf32>
    %19 = vector.shape_cast %18 : vector<8x16x128xf32> to vector<128x128xf32>
    %20 = vector.extract_strided_slice %17 {offsets = [0, 1, 0], sizes = [8, 16, 128], strides = [1, 1, 1]} : vector<8x18x128xf32> to vector<8x16x128xf32>
    %21 = vector.shape_cast %20 : vector<8x16x128xf32> to vector<128x128xf32>
    %22 = vector.extract_strided_slice %17 {offsets = [0, 2, 0], sizes = [8, 16, 128], strides = [1, 1, 1]} : vector<8x18x128xf32> to vector<8x16x128xf32>
    %23 = vector.shape_cast %22 : vector<8x16x128xf32> to vector<128x128xf32>
    %24 = vector.extract_strided_slice %9 {offsets = [2, 0, 0], sizes = [8, 18, 128], strides = [1, 1, 1]} : vector<10x18x128xf32> to vector<8x18x128xf32>
    %25 = vector.extract_strided_slice %24 {offsets = [0, 0, 0], sizes = [8, 16, 128], strides = [1, 1, 1]} : vector<8x18x128xf32> to vector<8x16x128xf32>
    %26 = vector.shape_cast %25 : vector<8x16x128xf32> to vector<128x128xf32>
    %27 = vector.extract_strided_slice %24 {offsets = [0, 1, 0], sizes = [8, 16, 128], strides = [1, 1, 1]} : vector<8x18x128xf32> to vector<8x16x128xf32>
    %28 = vector.shape_cast %27 : vector<8x16x128xf32> to vector<128x128xf32>
    %29 = vector.extract_strided_slice %24 {offsets = [0, 2, 0], sizes = [8, 16, 128], strides = [1, 1, 1]} : vector<8x18x128xf32> to vector<8x16x128xf32>
    %30 = vector.shape_cast %29 : vector<8x16x128xf32> to vector<128x128xf32>
    %31 = tpu.concatenate %12, %14, %16, %19, %21, %23, %26, %28, %30 in 1 : vector<128x128xf32>, vector<128x128xf32>, vector<128x128xf32>, vector<128x128xf32>, vector<128x128xf32>, vector<128x128xf32>, vector<128x128xf32>, vector<128x128xf32>, vector<128x128xf32> -> vector<128x1152xf32>
    %c0_10 = arith.constant 0 : index
    %c0_11 = arith.constant 0 : index
    %32 = vector.load %arg6[%c0_10, %c0_11] : memref<1152x128xf32, #tpu.memory_space<vmem>>, vector<1152x128xf32>
    %cst = arith.constant dense<0.000000e+00> : vector<128x128xf32>
    %33 = tpu.matmul %31, %32, %cst {dimension_numbers = #tpu.dot_dimension_numbers<[1], [0], [0], [1], [0, 0, 1, 1], [], []>} : vector<128x1152xf32>, vector<1152x128xf32>, vector<128x128xf32> -> vector<128x128xf32>
    %c0_12 = arith.constant 0 : index
    %c0_13 = arith.constant 0 : index
    %c0_14 = arith.constant 0 : index
    %34 = vector.load %arg3[%c0_12, %c0_13, %c0_14] : memref<1x1x128xf32, #tpu.memory_space<vmem>>, vector<1x1x128xf32>
    %35 = vector.shape_cast %34 : vector<1x1x128xf32> to vector<128xf32>
    %36 = vector.shape_cast %35 : vector<128xf32> to vector<1x128xf32>
    %37 = vector.broadcast %36 : vector<1x128xf32> to vector<128x128xf32>
    %38 = arith.mulf %33, %37 : vector<128x128xf32>
    %39 = vector.shape_cast %38 : vector<128x128xf32> to vector<8x16x128xf32>
    %c0_15 = arith.constant 0 : index
    %c0_16 = arith.constant 0 : index
    %c0_17 = arith.constant 0 : index
    %c0_18 = arith.constant 0 : index
    %40 = vector.load %arg7[%c0_15, %c0_16, %c0_17, %c0_18] : memref<1x8x16x128xf32, #tpu.memory_space<vmem>>, vector<1x8x16x128xf32>
    %41 = vector.shape_cast %40 : vector<1x8x16x128xf32> to vector<8x16x128xf32>
    %42 = vector.shape_cast %39 : vector<8x16x128xf32> to vector<1x8x16x128xf32>
    tpu.vector_store %arg7[%c0_15, %c0_16, %c0_17, %c0_18], %42 {strides = array<i32>} : memref<1x8x16x128xf32, #tpu.memory_space<vmem>>, vector<1x8x16x128xf32>,
    return
  }
  func.func @transform_0(%arg0: i32, %arg1: i32) -> (i32, i32, i32) {
    %c0_i32 = arith.constant 0 : i32
    %c0_i32_0 = arith.constant 0 : i32
    %c0_i32_1 = arith.constant 0 : i32
    return %arg0, %c0_i32, %c0_i32_0 : i32, i32, i32
  }
  func.func @transform_1(%arg0: i32, %arg1: i32) -> (i32, i32, i32) {
    %c0_i32 = arith.constant 0 : i32
    %c0_i32_0 = arith.constant 0 : i32
    %c0_i32_1 = arith.constant 0 : i32
    return %arg0, %c0_i32, %c0_i32_0 : i32, i32, i32
  }
  func.func @transform_2(%arg0: i32, %arg1: i32) -> (i32, i32, i32, i32) {
    %c0_i32 = arith.constant 0 : i32
    %c0_i32_0 = arith.constant 0 : i32
    %c0_i32_1 = arith.constant 0 : i32
    return %arg0, %arg1, %c0_i32, %c0_i32_0 : i32, i32, i32, i32
  }
  func.func @transform_3(%arg0: i32, %arg1: i32) -> (i32, i32, i32, i32) {
    %c1_i32 = arith.constant 1 : i32
    %0 = arith.addi %arg1, %c1_i32 : i32
    %c4_i32 = arith.constant 4 : i32
    %1 = arith.muli %0, %c4_i32 : i32
    %c0_i32 = arith.constant 0 : i32
    %c0_i32_0 = arith.constant 0 : i32
    %c0_i32_1 = arith.constant 0 : i32
    return %arg0, %1, %c0_i32, %c0_i32_0 : i32, i32, i32, i32
  }
  func.func @transform_4(%arg0: i32, %arg1: i32) -> (i32, i32) {
    %c0_i32 = arith.constant 0 : i32
    %c0_i32_0 = arith.constant 0 : i32
    %c0_i32_1 = arith.constant 0 : i32
    return %c0_i32, %c0_i32_0 : i32, i32
  }
  func.func @transform_5(%arg0: i32, %arg1: i32) -> (i32, i32, i32, i32) {
    %c0_i32 = arith.constant 0 : i32
    %c0_i32_0 = arith.constant 0 : i32
    %c0_i32_1 = arith.constant 0 : i32
    return %arg0, %arg1, %c0_i32, %c0_i32_0 : i32, i32, i32, i32
  }
}

</mosaic_0001>

<llo_original>
// kernel: conv2d_weight_modulate.1
$region0: #{conv2d_weight_modulate.1}
  #allocation0 [shape = 'u32[]', space=smem, size = 0x4, offset = 0x4, fixed_abs, tag = 'smem constant byte address 0x4 - core index']
  #allocation1 [shape = 'u32[144,128]{1,0:T(1,128)}', space=vmem, size = 0x12000, scoped, tag = 'internal scratch']
  %s0 = inlined_call_operand.vmem [shape: f32[2,1,128], index: 0, kind: input, shape index: {}]
  %s1 = inlined_call_operand.vmem [shape: f32[2,1,128], index: 1, kind: input, shape index: {}]
  %s2 = inlined_call_operand.vmem [shape: f32[2,18,18,128], index: 2, kind: input, shape index: {}, may-alias: {2,3}]
  %s3 = inlined_call_operand.vmem [shape: f32[2,18,18,128], index: 3, kind: input, shape index: {}, may-alias: {2,3}]
  %s4 = inlined_call_operand.vmem [shape: f32[1152,128], index: 4, kind: input, shape index: {}]
  %s5 = inlined_call_operand.vmem [shape: f32[2,16,16,128], index: 5, kind: output, shape index: {}]
  %s6 = sld [smem:[#allocation0]]
  $region53: #{conv2d_weight_modulate.1} parent=0
    _
  %s8 = ssub.s32 1, %s6
  %s9 = scalar_select 0, %s8, %s6
  loop: start=0, step=1, limit=6
  $region2: #{conv2d_weight_modulate.1} parent=0 // loop_pre_header
    _
  $region3: #{conv2d_weight_modulate.1} parent=0 // loop_header
    %s11 = sphi 0, %s15
    %p12 = scmp.ge.s32.totalorder %s11, 6
    %s18 = sphi 0, %s30
    %s19 = sphi 0, %s26
    %s20 = sphi 0, %s18
    %s21 = sphi 0, %s19
    %s22 = sphi 0, %s20
    %s23 = sphi 0, %s21
    %s33 = sphi 0, %s35
    %s36 = sphi 0, %s33
    %s37 = sphi 0, %s36
    %s53 = sphi 0, %s37
    %s59 = sphi 0, %s61
    %s62 = sphi 0, %s59
    %s63 = sphi 0, %s62
    %s79 = sphi 0, %s63
    %s87 = sphi 0, %s89
    %s90 = sphi 0, %s87
    %s91 = sphi 0, %s90
    %s107 = sphi 0, %s91
    %s119 = sphi 0, %s121
    %s122 = sphi 0, %s119
    %s123 = sphi 0, %s122
    %s139 = sphi 0, %s123
    %s143 = sphi 0, %s143
    %s145 = sphi 0, %s143
    %s146 = sphi 0, %s145
    %s160 = sphi 0, %s146
    %s168 = sphi 0, %s170
    %s171 = sphi 0, %s168
    %s172 = sphi 0, %s171
    %s188 = sphi 0, %s172
  $region4: #{conv2d_weight_modulate.1} parent=0 // loop_header_branch
    %14 = sbr.rel (%p12) target = $region8
  $region5: #{conv2d_weight_modulate.1} parent=0 // loop_body
    %s16 = ssub.s32 %s11, 1
    %s17 = ssub.s32 %s11, 2
    %s24 = sadd.s32 1, %s19
    %p25 = scmp.ge.s32.totalorder %s24, 2
    %s26 = scalar_select %p25, 0, %s24
    %s27 = sadd.s32 1, %s18
    %s28 = scalar_select %p25, %s27, %s18
    %p29 = scmp.ge.s32.totalorder %s28, 2
    %s30 = scalar_select %p29, 0, %s28
    %s31 = ssub.s32 %s18, %s30
    %p32 = scmp.eq.s32.totalorder %s31, 0
    %s34 = sadd.s32 %s33, 1
    %s35 = scalar_select %p32, %s33, %s34
    %p38 = pneg %p32
    %p39 = scmp.eq.s32.totalorder %s11, 3
    %p40 = por %p38, %p39
    %p41 = scmp.ne.s32.totalorder %s33, %s36
    %p42 = scmp.eq.s32.totalorder %s11, 0
    %p43 = por %p41, %p42
    %p44 = scmp.ne.s32.totalorder %s33, %s36
    %p45 = scmp.eq.s32.totalorder %s16, 3
    %p46 = por %p44, %p45
    %p47 = scmp.ne.s32.totalorder %s36, %s37
    %p48 = scmp.eq.s32.totalorder %s16, 0
    %p49 = por %p47, %p48
    %p50 = scmp.ne.s32.totalorder %s36, %s37
    %p51 = scmp.eq.s32.totalorder %s17, 3
    %p52 = por %p50, %p51
    %p54 = scmp.ne.s32.totalorder %s37, %s53
    %p55 = scmp.eq.s32.totalorder %s17, 0
    %p56 = por %p54, %p55
    %s57 = ssub.s32 %s18, %s30
    %p58 = scmp.eq.s32.totalorder %s57, 0
    %s60 = sadd.s32 %s59, 1
    %s61 = scalar_select %p58, %s59, %s60
    %p64 = pneg %p58
    %p65 = scmp.eq.s32.totalorder %s11, 3
    %p66 = por %p64, %p65
    %p67 = scmp.ne.s32.totalorder %s59, %s62
    %p68 = scmp.eq.s32.totalorder %s11, 0
    %p69 = por %p67, %p68
    %p70 = scmp.ne.s32.totalorder %s59, %s62
    %p71 = scmp.eq.s32.totalorder %s16, 3
    %p72 = por %p70, %p71
    %p73 = scmp.ne.s32.totalorder %s62, %s63
    %p74 = scmp.eq.s32.totalorder %s16, 0
    %p75 = por %p73, %p74
    %p76 = scmp.ne.s32.totalorder %s62, %s63
    %p77 = scmp.eq.s32.totalorder %s17, 3
    %p78 = por %p76, %p77
    %p80 = scmp.ne.s32.totalorder %s63, %s79
    %p81 = scmp.eq.s32.totalorder %s17, 0
    %p82 = por %p80, %p81
    %s83 = ssub.s32 %s18, %s30
    %s84 = ssub.s32 %s19, %s26
    %s85 = sor.u32 %s83, %s84
    %p86 = scmp.eq.s32.totalorder %s85, 0
    %s88 = sadd.s32 %s87, 1
    %s89 = scalar_select %p86, %s87, %s88
    %p92 = pneg %p86
    %p93 = scmp.eq.s32.totalorder %s11, 3
    %p94 = por %p92, %p93
    %p95 = scmp.ne.s32.totalorder %s87, %s90
    %p96 = scmp.eq.s32.totalorder %s11, 0
    %p97 = por %p95, %p96
    %p98 = scmp.ne.s32.totalorder %s87, %s90
    %p99 = scmp.eq.s32.totalorder %s16, 3
    %p100 = por %p98, %p99
    %p101 = scmp.ne.s32.totalorder %s90, %s91
    %p102 = scmp.eq.s32.totalorder %s16, 0
    %p103 = por %p101, %p102
    %p104 = scmp.ne.s32.totalorder %s90, %s91
    %p105 = scmp.eq.s32.totalorder %s17, 3
    %p106 = por %p104, %p105
    %p108 = scmp.ne.s32.totalorder %s91, %s107
    %p109 = scmp.eq.s32.totalorder %s17, 0
    %p110 = por %p108, %p109
    %s111 = sadd.s32 %s19, 1
    %s112 = smul.u32 %s111, 4
    %s113 = sadd.s32 %s26, 1
    %s114 = smul.u32 %s113, 4
    %s115 = ssub.s32 %s18, %s30
    %s116 = ssub.s32 %s112, %s114
    %s117 = sor.u32 %s115, %s116
    %p118 = scmp.eq.s32.totalorder %s117, 0
    %s120 = sadd.s32 %s119, 1
    %s121 = scalar_select %p118, %s119, %s120
    %p124 = pneg %p118
    %p125 = scmp.eq.s32.totalorder %s11, 3
    %p126 = por %p124, %p125
    %p127 = scmp.ne.s32.totalorder %s119, %s122
    %p128 = scmp.eq.s32.totalorder %s11, 0
    %p129 = por %p127, %p128
    %p130 = scmp.ne.s32.totalorder %s119, %s122
    %p131 = scmp.eq.s32.totalorder %s16, 3
    %p132 = por %p130, %p131
    %p133 = scmp.ne.s32.totalorder %s122, %s123
    %p134 = scmp.eq.s32.totalorder %s16, 0
    %p135 = por %p133, %p134
    %p136 = scmp.ne.s32.totalorder %s122, %s123
    %p137 = scmp.eq.s32.totalorder %s17, 3
    %p138 = por %p136, %p137
    %p140 = scmp.ne.s32.totalorder %s123, %s139
    %p141 = scmp.eq.s32.totalorder %s17, 0
    %p142 = por %p140, %p141
    %s144 = sadd.s32 %s143, 1
    %p147 = scmp.eq.s32.totalorder %s11, 3
    %p148 = scmp.ne.s32.totalorder %s143, %s145
    %p149 = scmp.eq.s32.totalorder %s11, 0
    %p150 = por %p148, %p149
    %p151 = scmp.ne.s32.totalorder %s143, %s145
    %p152 = scmp.eq.s32.totalorder %s16, 3
    %p153 = por %p151, %p152
    %p154 = scmp.ne.s32.totalorder %s145, %s146
    %p155 = scmp.eq.s32.totalorder %s16, 0
    %p156 = por %p154, %p155
    %p157 = scmp.ne.s32.totalorder %s145, %s146
    %p158 = scmp.eq.s32.totalorder %s17, 3
    %p159 = por %p157, %p158
    %p161 = scmp.ne.s32.totalorder %s146, %s160
    %p162 = scmp.eq.s32.totalorder %s17, 0
    %p163 = por %p161, %p162
    %s164 = ssub.s32 %s18, %s30
    %s165 = ssub.s32 %s19, %s26
    %s166 = sor.u32 %s164, %s165
    %p167 = scmp.eq.s32.totalorder %s166, 0
    %s169 = sadd.s32 %s168, 1
    %s170 = scalar_select %p167, %s168, %s169
    %p173 = pneg %p167
    %p174 = scmp.eq.s32.totalorder %s11, 3
    %p175 = por %p173, %p174
    %p176 = scmp.ne.s32.totalorder %s168, %s171
    %p177 = scmp.eq.s32.totalorder %s11, 0
    %p178 = por %p176, %p177
    %p179 = scmp.ne.s32.totalorder %s168, %s171
    %p180 = scmp.eq.s32.totalorder %s16, 3
    %p181 = por %p179, %p180
    %p182 = scmp.ne.s32.totalorder %s171, %s172
    %p183 = scmp.eq.s32.totalorder %s16, 0
    %p184 = por %p182, %p183
    %p185 = scmp.ne.s32.totalorder %s171, %s172
    %p186 = scmp.eq.s32.totalorder %s17, 3
    %p187 = por %p185, %p186
    %p189 = scmp.ne.s32.totalorder %s172, %s188
    %p190 = scmp.eq.s32.totalorder %s17, 0
    %p191 = por %p189, %p190
    %p192 = scmp.le.s32.totalorder 1, %s11
    %p193 = scmp.lt.s32.totalorder %s11, 5
    %p194 = pnand %p192, %p193
    %p195 = pneg %p194
    // Predicated region
    $region9: #{conv2d_weight_modulate.1} parent=5 // pred_check
      _
    $region10: #{conv2d_weight_modulate.1} parent=5 // pred_check_branch
      %197 = sbr.rel (%p194) target = $region12
    $region11: #{conv2d_weight_modulate.1} parent=5 // pred_region
      %s198 = ssub.s32 %s11, 1
      // Predicated region
      $region13: #{conv2d_weight_modulate.1} parent=11 // pred_check
        %p199 = pneg %p156
      $region14: #{conv2d_weight_modulate.1} parent=11 // pred_check_branch
        %201 = sbr.rel (%p199) target = $region16
      $region15: #{conv2d_weight_modulate.1} parent=11 // pred_region
        _
      $region16: #{conv2d_weight_modulate.1} parent=11 // pred_fallthru
        _
    $region12: #{conv2d_weight_modulate.1} parent=5 // pred_fallthru
      _
    %p202 = scmp.lt.s32.totalorder %s11, 4
    // Predicated region
    $region17: #{conv2d_weight_modulate.1} parent=5 // pred_check
      %p203 = pneg %p202
    $region18: #{conv2d_weight_modulate.1} parent=5 // pred_check_branch
      %205 = sbr.rel (%p203) target = $region20
    $region19: #{conv2d_weight_modulate.1} parent=5 // pred_region
      // Predicated region
      $region21: #{conv2d_weight_modulate.1} parent=19 // pred_check
        %p206 = pneg %p43
      $region22: #{conv2d_weight_modulate.1} parent=19 // pred_check_branch
        %208 = sbr.rel (%p206) target = $region24
      $region23: #{conv2d_weight_modulate.1} parent=19 // pred_region
        %p209 = scmp.lt.s32.totalorder %s18, 1
        %s210 = scalar_select %p209, %s18, 1
        %s211 = scalar_lea.vmem %s0, %s210
      $region24: #{conv2d_weight_modulate.1} parent=19 // pred_fallthru
        _
      // Predicated region
      $region25: #{conv2d_weight_modulate.1} parent=19 // pred_check
        %p212 = pneg %p69
      $region26: #{conv2d_weight_modulate.1} parent=19 // pred_check_branch
        %214 = sbr.rel (%p212) target = $region28
      $region27: #{conv2d_weight_modulate.1} parent=19 // pred_region
        %p215 = scmp.lt.s32.totalorder %s18, 1
        %s216 = scalar_select %p215, %s18, 1
        %s217 = scalar_lea.vmem %s1, %s216
      $region28: #{conv2d_weight_modulate.1} parent=19 // pred_fallthru
        _
      // Predicated region
      $region29: #{conv2d_weight_modulate.1} parent=19 // pred_check
        %p218 = pneg %p97
      $region30: #{conv2d_weight_modulate.1} parent=19 // pred_check_branch
        %220 = sbr.rel (%p218) target = $region32
      $region31: #{conv2d_weight_modulate.1} parent=19 // pred_region
        %s221 = smul.u32 8, %s19
        %s222 = ssub.s32 18, %s221
        %p223 = scmp.lt.s32.totalorder %s222, 8
        %s224 = scalar_select %p223, %s222, 8
        %s225 = smul.u32 128, %s224
        %s226 = smul.u32 %s225, 3
        %p227 = scmp.lt.s32.totalorder %s18, 1
        %s228 = scalar_select %p227, %s18, 1
        %p229 = scmp.lt.s32.totalorder %s221, 17
        %s230 = scalar_select %p229, %s221, 17
        %s231 = smul.addr %s230, 3
        %s232 = smul.addr %s228, 54
        %s233 = sadd.s32 %s231, %s232
        %s234 = smul.addr %s233, 8
        %s235 = scalar_lea.vmem %s2, %s234
        %s236 = smul.u32 8, %s19
        %s237 = ssub.s32 18, %s236
        %p238 = scmp.lt.s32.totalorder %s237, 8
        %s239 = scalar_select %p238, %s237, 8
        %s240 = smul.u32 128, %s239
        %s241 = smul.u32 %s240, 3
      $region32: #{conv2d_weight_modulate.1} parent=19 // pred_fallthru
        _
      // Predicated region
      $region33: #{conv2d_weight_modulate.1} parent=19 // pred_check
        %p242 = pneg %p129
      $region34: #{conv2d_weight_modulate.1} parent=19 // pred_check_branch
        %244 = sbr.rel (%p242) target = $region36
      $region35: #{conv2d_weight_modulate.1} parent=19 // pred_region
        %s245 = sadd.s32 %s19, 1
        %s246 = smul.u32 %s245, 4
        %s247 = smul.u32 2, %s246
        %p248 = scmp.lt.s32.totalorder %s18, 1
        %s249 = scalar_select %p248, %s18, 1
        %p250 = scmp.lt.s32.totalorder %s247, 17
        %s251 = scalar_select %p250, %s247, 17
        %s252 = smul.addr %s251, 3
        %s253 = smul.addr %s249, 54
        %s254 = sadd.s32 %s252, %s253
        %s255 = smul.addr %s254, 8
        %s256 = scalar_lea.vmem %s3, %s255
        %s257 = sadd.s32 %s19, 1
        %s258 = smul.u32 %s257, 4
        %s259 = smul.u32 2, %s258
      $region36: #{conv2d_weight_modulate.1} parent=19 // pred_fallthru
        _
    $region20: #{conv2d_weight_modulate.1} parent=5 // pred_fallthru
      _
    %p260 = scmp.le.s32.totalorder 1, %s11
    %p261 = scmp.lt.s32.totalorder %s11, 5
    %p262 = pnand %p260, %p261
    %p263 = pneg %p262
    // Predicated region
    $region37: #{conv2d_weight_modulate.1} parent=5 // pred_check
      _
    $region38: #{conv2d_weight_modulate.1} parent=5 // pred_check_branch
      %265 = sbr.rel (%p262) target = $region40
    $region39: #{conv2d_weight_modulate.1} parent=5 // pred_region
      %s266 = ssub.s32 %s11, 1
      %p267 = scmp.lt.s32.totalorder %s20, 1
      %s268 = scalar_select %p267, %s20, 1
      %s269 = scalar_lea.vmem %s0, %s268
      %p270 = pneg %p49
      %p271 = pneg %p46
      %p272 = scmp.lt.s32.totalorder %s20, 1
      %s273 = scalar_select %p272, %s20, 1
      %s274 = scalar_lea.vmem %s1, %s273
      %p275 = pneg %p75
      %p276 = pneg %p72
      %s277 = smul.u32 8, %s21
      %s278 = ssub.s32 18, %s277
      %p279 = scmp.lt.s32.totalorder %s278, 8
      %s280 = scalar_select %p279, %s278, 8
      %s281 = smul.u32 128, %s280
      %s282 = smul.u32 %s281, 3
      %p283 = scmp.lt.s32.totalorder %s20, 1
      %s284 = scalar_select %p283, %s20, 1
      %p285 = scmp.lt.s32.totalorder %s277, 17
      %s286 = scalar_select %p285, %s277, 17
      %s287 = smul.addr %s286, 3
      %s288 = smul.addr %s284, 54
      %s289 = sadd.s32 %s287, %s288
      %s290 = smul.addr %s289, 8
      %s291 = scalar_lea.vmem %s2, %s290
      %p292 = pneg %p103
      %p293 = pneg %p100
      %s294 = sadd.s32 %s21, 1
      %s295 = smul.u32 %s294, 4
      %s296 = smul.u32 2, %s295
      %p297 = scmp.lt.s32.totalorder %s20, 1
      %s298 = scalar_select %p297, %s20, 1
      %p299 = scmp.lt.s32.totalorder %s296, 17
      %s300 = scalar_select %p299, %s296, 17
      %s301 = smul.addr %s300, 3
      %s302 = smul.addr %s298, 54
      %s303 = sadd.s32 %s301, %s302
      %s304 = smul.addr %s303, 8
      %s305 = scalar_lea.vmem %s3, %s304
      %p306 = pneg %p135
      %p307 = pneg %p132
      %p308 = pneg %p156
      %p309 = pneg %p153
      %p310 = pneg %p184
      %p311 = pneg %p181
      %s312 = smul.u32 8, %s21
      %p313 = scmp.lt.s32.totalorder %s20, 1
      %s314 = scalar_select %p313, %s20, 1
      %p315 = scmp.lt.s32.totalorder %s312, 15
      %s316 = scalar_select %p315, %s312, 15
      %s317 = smul.addr %s316, 2
      %s318 = smul.addr %s314, 32
      %s319 = sadd.s32 %s317, %s318
      %s320 = smul.addr %s319, 8
      %s321 = scalar_lea.vmem %s5, %s320
      %p322 = scmp.lt.s32.totalorder %s20, 1
      %s323 = scalar_select %p322, %s20, 1
      %s324 = scalar_lea.vmem %s0, %s323
      %p325 = scmp.lt.s32.totalorder %s20, 1
      %s326 = scalar_select %p325, %s20, 1
      %s327 = scalar_lea.vmem %s1, %s326
      %s328 = smul.u32 8, %s21
      %s329 = ssub.s32 18, %s328
      %p330 = scmp.lt.s32.totalorder %s329, 8
      %s331 = scalar_select %p330, %s329, 8
      %s332 = smul.u32 128, %s331
      %s333 = smul.u32 %s332, 3
      %p334 = scmp.lt.s32.totalorder %s20, 1
      %s335 = scalar_select %p334, %s20, 1
      %p336 = scmp.lt.s32.totalorder %s328, 17
      %s337 = scalar_select %p336, %s328, 17
      %s338 = smul.addr %s337, 3
      %s339 = smul.addr %s335, 54
      %s340 = sadd.s32 %s338, %s339
      %s341 = smul.addr %s340, 8
      %s342 = scalar_lea.vmem %s2, %s341
      %s343 = smul.u32 8, %s21
      %s344 = ssub.s32 18, %s343
      %p345 = scmp.lt.s32.totalorder %s344, 8
      %s346 = scalar_select %p345, %s344, 8
      %s347 = smul.u32 128, %s346
      %s348 = smul.u32 %s347, 3
      %s349 = sadd.s32 %s21, 1
      %s350 = smul.u32 %s349, 4
      %s351 = smul.u32 2, %s350
      %p352 = scmp.lt.s32.totalorder %s20, 1
      %s353 = scalar_select %p352, %s20, 1
      %p354 = scmp.lt.s32.totalorder %s351, 17
      %s355 = scalar_select %p354, %s351, 17
      %s356 = smul.addr %s355, 3
      %s357 = smul.addr %s353, 54
      %s358 = sadd.s32 %s356, %s357
      %s359 = smul.addr %s358, 8
      %s360 = scalar_lea.vmem %s3, %s359
      %s361 = sadd.s32 %s21, 1
      %s362 = smul.u32 %s361, 4
      %s363 = smul.u32 2, %s362
      %s364 = smul.u32 8, %s21
      %p365 = scmp.lt.s32.totalorder %s20, 1
      %s366 = scalar_select %p365, %s20, 1
      %p367 = scmp.lt.s32.totalorder %s364, 15
      %s368 = scalar_select %p367, %s364, 15
      %s369 = smul.addr %s368, 2
      %s370 = smul.addr %s366, 32
      %s371 = sadd.s32 %s369, %s370
      %s372 = smul.addr %s371, 8
      %s373 = scalar_lea.vmem %s5, %s372
      %s374 = smul.u32 8, %s21
      %v375 = vld [vmem:[%s324] sm:$0x1]
      %v376 = vld [vmem:[%s342] sm:$0xff]
      %v377 = vld [vmem:[%s342 + $0x8] sm:$0xff]
      %v378 = vld [vmem:[%s342 + $0x10] sm:$0x3]
      %v379 = vld [vmem:[%s342 + $0x18] sm:$0xff]
      %v380 = vld [vmem:[%s342 + $0x20] sm:$0xff]
      %v381 = vld [vmem:[%s342 + $0x28] sm:$0x3]
      %v382 = vld [vmem:[%s342 + $0x30] sm:$0xff]
      %v383 = vld [vmem:[%s342 + $0x38] sm:$0xff]
      %v384 = vld [vmem:[%s342 + $0x40] sm:$0x3]
      %v385 = vld [vmem:[%s342 + $0x48] sm:$0xff]
      %v386 = vld [vmem:[%s342 + $0x50] sm:$0xff]
      %v387 = vld [vmem:[%s342 + $0x58] sm:$0x3]
      %v388 = vld [vmem:[%s342 + $0x60] sm:$0xff]
      %v389 = vld [vmem:[%s342 + $0x68] sm:$0xff]
      %v390 = vld [vmem:[%s342 + $0x70] sm:$0x3]
      %v391 = vld [vmem:[%s342 + $0x78] sm:$0xff]
      %v392 = vld [vmem:[%s342 + $0x80] sm:$0xff]
      %v393 = vld [vmem:[%s342 + $0x88] sm:$0x3]
      %v394 = vld [vmem:[%s342 + $0x90] sm:$0xff]
      %v395 = vld [vmem:[%s342 + $0x98] sm:$0xff]
      %v396 = vld [vmem:[%s342 + $0xa0] sm:$0x3]
      %v397 = vld [vmem:[%s342 + $0xa8] sm:$0xff]
      %v398 = vld [vmem:[%s342 + $0xb0] sm:$0xff]
      %v399 = vld [vmem:[%s342 + $0xb8] sm:$0x3]
      %v400 = vld [vmem:[%s360] sm:$0xff]
      %v401 = vld [vmem:[%s360 + $0x8] sm:$0xff]
      %v402 = vld [vmem:[%s360 + $0x10] sm:$0x3]
      %v403 = vld [vmem:[%s360 + $0x18] sm:$0xff]
      %v404 = vld [vmem:[%s360 + $0x20] sm:$0xff]
      %v405 = vld [vmem:[%s360 + $0x28] sm:$0x3]
      %v407 = vlaneseq
      %v408 = vshrl.u32 %v407, 7
      %v409 = vsub.s32 0, %v408
      %v410 = vrot.slane %v375, %v409
      %v412 = vmul.f32 %v376, %v410
      %v413 = vmul.f32 %v377, %v410
      %v414 = vmul.f32 %v378, %v410
      %v415 = vmul.f32 %v379, %v410
      %v416 = vmul.f32 %v380, %v410
      %v417 = vmul.f32 %v381, %v410
      %v418 = vmul.f32 %v382, %v410
      %v419 = vmul.f32 %v383, %v410
      %v420 = vmul.f32 %v384, %v410
      %v421 = vmul.f32 %v385, %v410
      %v422 = vmul.f32 %v386, %v410
      %v423 = vmul.f32 %v387, %v410
      %v424 = vmul.f32 %v388, %v410
      %v425 = vmul.f32 %v389, %v410
      %v426 = vmul.f32 %v390, %v410
      %v427 = vmul.f32 %v391, %v410
      %v428 = vmul.f32 %v392, %v410
      %v429 = vmul.f32 %v393, %v410
      %v430 = vmul.f32 %v394, %v410
      %v431 = vmul.f32 %v395, %v410
      %v432 = vmul.f32 %v396, %v410
      %v433 = vmul.f32 %v397, %v410
      %v434 = vmul.f32 %v398, %v410
      %v435 = vmul.f32 %v399, %v410
      %v436 = vmul.f32 %v400, %v410
      %v437 = vmul.f32 %v401, %v410
      %v438 = vmul.f32 %v402, %v410
      %v439 = vmul.f32 %v403, %v410
      %v440 = vmul.f32 %v404, %v410
      %v441 = vmul.f32 %v405, %v410
      %vm466 = vcmask 1046528
      %v467 = vrot.slane %v412, 1
      %v468 = vrot.slane %v413, 1
      %v469 = vsel %vm466, %v467, %v468
      %v470 = vrot.slane %v414, 1
      %v471 = vsel %vm466, %v468, %v470
      %v472 = vrot.slane %v415, 1
      %v473 = vrot.slane %v416, 1
      %v474 = vsel %vm466, %v472, %v473
      %v475 = vrot.slane %v417, 1
      %v476 = vsel %vm466, %v473, %v475
      %v477 = vrot.slane %v418, 1
      %v478 = vrot.slane %v419, 1
      %v479 = vsel %vm466, %v477, %v478
      %v480 = vrot.slane %v420, 1
      %v481 = vsel %vm466, %v478, %v480
      %v482 = vrot.slane %v421, 1
      %v483 = vrot.slane %v422, 1
      %v484 = vsel %vm466, %v482, %v483
      %v485 = vrot.slane %v423, 1
      %v486 = vsel %vm466, %v483, %v485
      %v487 = vrot.slane %v424, 1
      %v488 = vrot.slane %v425, 1
      %v489 = vsel %vm466, %v487, %v488
      %v490 = vrot.slane %v426, 1
      %v491 = vsel %vm466, %v488, %v490
      %v492 = vrot.slane %v427, 1
      %v493 = vrot.slane %v428, 1
      %v494 = vsel %vm466, %v492, %v493
      %v495 = vrot.slane %v429, 1
      %v496 = vsel %vm466, %v493, %v495
      %v497 = vrot.slane %v430, 1
      %v498 = vrot.slane %v431, 1
      %v499 = vsel %vm466, %v497, %v498
      %v500 = vrot.slane %v432, 1
      %v501 = vsel %vm466, %v498, %v500
      %v502 = vrot.slane %v433, 1
      %v503 = vrot.slane %v434, 1
      %v504 = vsel %vm466, %v502, %v503
      %v505 = vrot.slane %v435, 1
      %v506 = vsel %vm466, %v503, %v505
      %vm523 = vcmask 1045504
      %v524 = vrot.slane %v412, 2
      %v525 = vrot.slane %v413, 2
      %v526 = vsel %vm523, %v524, %v525
      %v527 = vrot.slane %v414, 2
      %v528 = vsel %vm523, %v525, %v527
      %v529 = vrot.slane %v415, 2
      %v530 = vrot.slane %v416, 2
      %v531 = vsel %vm523, %v529, %v530
      %v532 = vrot.slane %v417, 2
      %v533 = vsel %vm523, %v530, %v532
      %v534 = vrot.slane %v418, 2
      %v535 = vrot.slane %v419, 2
      %v536 = vsel %vm523, %v534, %v535
      %v537 = vrot.slane %v420, 2
      %v538 = vsel %vm523, %v535, %v537
      %v539 = vrot.slane %v421, 2
      %v540 = vrot.slane %v422, 2
      %v541 = vsel %vm523, %v539, %v540
      %v542 = vrot.slane %v423, 2
      %v543 = vsel %vm523, %v540, %v542
      %v544 = vrot.slane %v424, 2
      %v545 = vrot.slane %v425, 2
      %v546 = vsel %vm523, %v544, %v545
      %v547 = vrot.slane %v426, 2
      %v548 = vsel %vm523, %v545, %v547
      %v549 = vrot.slane %v427, 2
      %v550 = vrot.slane %v428, 2
      %v551 = vsel %vm523, %v549, %v550
      %v552 = vrot.slane %v429, 2
      %v553 = vsel %vm523, %v550, %v552
      %v554 = vrot.slane %v430, 2
      %v555 = vrot.slane %v431, 2
      %v556 = vsel %vm523, %v554, %v555
      %v557 = vrot.slane %v432, 2
      %v558 = vsel %vm523, %v555, %v557
      %v559 = vrot.slane %v433, 2
      %v560 = vrot.slane %v434, 2
      %v561 = vsel %vm523, %v559, %v560
      %v562 = vrot.slane %v435, 2
      %v563 = vsel %vm523, %v560, %v562
      %v583 = vrot.slane %v436, 1
      %v584 = vrot.slane %v437, 1
      %v585 = vsel %vm466, %v583, %v584
      %v586 = vrot.slane %v438, 1
      %v587 = vsel %vm466, %v584, %v586
      %v590 = vrot.slane %v436, 2
      %v591 = vrot.slane %v437, 2
      %v592 = vsel %vm523, %v590, %v591
      %v593 = vrot.slane %v438, 2
      %v594 = vsel %vm523, %v591, %v593
      %v600 = vrot.slane %v439, 1
      %v601 = vrot.slane %v440, 1
      %v602 = vsel %vm466, %v600, %v601
      %v603 = vrot.slane %v441, 1
      %v604 = vsel %vm466, %v601, %v603
      %v607 = vrot.slane %v439, 2
      %v608 = vrot.slane %v440, 2
      %v609 = vsel %vm523, %v607, %v608
      %v610 = vrot.slane %v441, 2
      %v611 = vsel %vm523, %v608, %v610
      %v614 = vld [vmem:[%s4] sm:$0xff]
      %v615 = vld [vmem:[%s4 + $0x8] sm:$0xff]
      %v616 = vld [vmem:[%s4 + $0x10] sm:$0xff]
      %v617 = vld [vmem:[%s4 + $0x18] sm:$0xff]
      %v618 = vld [vmem:[%s4 + $0x20] sm:$0xff]
      %v619 = vld [vmem:[%s4 + $0x28] sm:$0xff]
      %v620 = vld [vmem:[%s4 + $0x30] sm:$0xff]
      %v621 = vld [vmem:[%s4 + $0x38] sm:$0xff]
      %v622 = vld [vmem:[%s4 + $0x40] sm:$0xff]
      %v623 = vld [vmem:[%s4 + $0x48] sm:$0xff]
      %v624 = vld [vmem:[%s4 + $0x50] sm:$0xff]
      %v625 = vld [vmem:[%s4 + $0x58] sm:$0xff]
      %v626 = vld [vmem:[%s4 + $0x60] sm:$0xff]
      %v627 = vld [vmem:[%s4 + $0x68] sm:$0xff]
      %v628 = vld [vmem:[%s4 + $0x70] sm:$0xff]
      %v629 = vld [vmem:[%s4 + $0x78] sm:$0xff]
      %v630 = vld [vmem:[%s4 + $0x80] sm:$0xff]
      %v631 = vld [vmem:[%s4 + $0x88] sm:$0xff]
      %v632 = vld [vmem:[%s4 + $0x90] sm:$0xff]
      %v633 = vld [vmem:[%s4 + $0x98] sm:$0xff]
      %v634 = vld [vmem:[%s4 + $0xa0] sm:$0xff]
      %v635 = vld [vmem:[%s4 + $0xa8] sm:$0xff]
      %v636 = vld [vmem:[%s4 + $0xb0] sm:$0xff]
      %v637 = vld [vmem:[%s4 + $0xb8] sm:$0xff]
      %v638 = vld [vmem:[%s4 + $0xc0] sm:$0xff]
      %v639 = vld [vmem:[%s4 + $0xc8] sm:$0xff]
      %v640 = vld [vmem:[%s4 + $0xd0] sm:$0xff]
      %v641 = vld [vmem:[%s4 + $0xd8] sm:$0xff]
      %v642 = vld [vmem:[%s4 + $0xe0] sm:$0xff]
      %v643 = vld [vmem:[%s4 + $0xe8] sm:$0xff]
      %v644 = vld [vmem:[%s4 + $0xf0] sm:$0xff]
      %v645 = vld [vmem:[%s4 + $0xf8] sm:$0xff]
      %v646 = vld [vmem:[%s4 + $0x100] sm:$0xff]
      %v647 = vld [vmem:[%s4 + $0x108] sm:$0xff]
      %v648 = vld [vmem:[%s4 + $0x110] sm:$0xff]
      %v649 = vld [vmem:[%s4 + $0x118] sm:$0xff]
      %v650 = vld [vmem:[%s4 + $0x120] sm:$0xff]
      %v651 = vld [vmem:[%s4 + $0x128] sm:$0xff]
      %v652 = vld [vmem:[%s4 + $0x130] sm:$0xff]
      %v653 = vld [vmem:[%s4 + $0x138] sm:$0xff]
      %v654 = vld [vmem:[%s4 + $0x140] sm:$0xff]
      %v655 = vld [vmem:[%s4 + $0x148] sm:$0xff]
      %v656 = vld [vmem:[%s4 + $0x150] sm:$0xff]
      %v657 = vld [vmem:[%s4 + $0x158] sm:$0xff]
      %v658 = vld [vmem:[%s4 + $0x160] sm:$0xff]
      %v659 = vld [vmem:[%s4 + $0x168] sm:$0xff]
      %v660 = vld [vmem:[%s4 + $0x170] sm:$0xff]
      %v661 = vld [vmem:[%s4 + $0x178] sm:$0xff]
      %v662 = vld [vmem:[%s4 + $0x180] sm:$0xff]
      %v663 = vld [vmem:[%s4 + $0x188] sm:$0xff]
      %v664 = vld [vmem:[%s4 + $0x190] sm:$0xff]
      %v665 = vld [vmem:[%s4 + $0x198] sm:$0xff]
      %v666 = vld [vmem:[%s4 + $0x1a0] sm:$0xff]
      %v667 = vld [vmem:[%s4 + $0x1a8] sm:$0xff]
      %v668 = vld [vmem:[%s4 + $0x1b0] sm:$0xff]
      %v669 = vld [vmem:[%s4 + $0x1b8] sm:$0xff]
      %v670 = vld [vmem:[%s4 + $0x1c0] sm:$0xff]
      %v671 = vld [vmem:[%s4 + $0x1c8] sm:$0xff]
      %v672 = vld [vmem:[%s4 + $0x1d0] sm:$0xff]
      %v673 = vld [vmem:[%s4 + $0x1d8] sm:$0xff]
      %v674 = vld [vmem:[%s4 + $0x1e0] sm:$0xff]
      %v675 = vld [vmem:[%s4 + $0x1e8] sm:$0xff]
      %v676 = vld [vmem:[%s4 + $0x1f0] sm:$0xff]
      %v677 = vld [vmem:[%s4 + $0x1f8] sm:$0xff]
      %v678 = vld [vmem:[%s4 + $0x200] sm:$0xff]
      %v679 = vld [vmem:[%s4 + $0x208] sm:$0xff]
      %v680 = vld [vmem:[%s4 + $0x210] sm:$0xff]
      %v681 = vld [vmem:[%s4 + $0x218] sm:$0xff]
      %v682 = vld [vmem:[%s4 + $0x220] sm:$0xff]
      %v683 = vld [vmem:[%s4 + $0x228] sm:$0xff]
      %v684 = vld [vmem:[%s4 + $0x230] sm:$0xff]
      %v685 = vld [vmem:[%s4 + $0x238] sm:$0xff]
      %v686 = vld [vmem:[%s4 + $0x240] sm:$0xff]
      %v687 = vld [vmem:[%s4 + $0x248] sm:$0xff]
      %v688 = vld [vmem:[%s4 + $0x250] sm:$0xff]
      %v689 = vld [vmem:[%s4 + $0x258] sm:$0xff]
      %v690 = vld [vmem:[%s4 + $0x260] sm:$0xff]
      %v691 = vld [vmem:[%s4 + $0x268] sm:$0xff]
      %v692 = vld [vmem:[%s4 + $0x270] sm:$0xff]
      %v693 = vld [vmem:[%s4 + $0x278] sm:$0xff]
      %v694 = vld [vmem:[%s4 + $0x280] sm:$0xff]
      %v695 = vld [vmem:[%s4 + $0x288] sm:$0xff]
      %v696 = vld [vmem:[%s4 + $0x290] sm:$0xff]
      %v697 = vld [vmem:[%s4 + $0x298] sm:$0xff]
      %v698 = vld [vmem:[%s4 + $0x2a0] sm:$0xff]
      %v699 = vld [vmem:[%s4 + $0x2a8] sm:$0xff]
      %v700 = vld [vmem:[%s4 + $0x2b0] sm:$0xff]
      %v701 = vld [vmem:[%s4 + $0x2b8] sm:$0xff]
      %v702 = vld [vmem:[%s4 + $0x2c0] sm:$0xff]
      %v703 = vld [vmem:[%s4 + $0x2c8] sm:$0xff]
      %v704 = vld [vmem:[%s4 + $0x2d0] sm:$0xff]
      %v705 = vld [vmem:[%s4 + $0x2d8] sm:$0xff]
      %v706 = vld [vmem:[%s4 + $0x2e0] sm:$0xff]
      %v707 = vld [vmem:[%s4 + $0x2e8] sm:$0xff]
      %v708 = vld [vmem:[%s4 + $0x2f0] sm:$0xff]
      %v709 = vld [vmem:[%s4 + $0x2f8] sm:$0xff]
      %v710 = vld [vmem:[%s4 + $0x300] sm:$0xff]
      %v711 = vld [vmem:[%s4 + $0x308] sm:$0xff]
      %v712 = vld [vmem:[%s4 + $0x310] sm:$0xff]
      %v713 = vld [vmem:[%s4 + $0x318] sm:$0xff]
      %v714 = vld [vmem:[%s4 + $0x320] sm:$0xff]
      %v715 = vld [vmem:[%s4 + $0x328] sm:$0xff]
      %v716 = vld [vmem:[%s4 + $0x330] sm:$0xff]
      %v717 = vld [vmem:[%s4 + $0x338] sm:$0xff]
      %v718 = vld [vmem:[%s4 + $0x340] sm:$0xff]
      %v719 = vld [vmem:[%s4 + $0x348] sm:$0xff]
      %v720 = vld [vmem:[%s4 + $0x350] sm:$0xff]
      %v721 = vld [vmem:[%s4 + $0x358] sm:$0xff]
      %v722 = vld [vmem:[%s4 + $0x360] sm:$0xff]
      %v723 = vld [vmem:[%s4 + $0x368] sm:$0xff]
      %v724 = vld [vmem:[%s4 + $0x370] sm:$0xff]
      %v725 = vld [vmem:[%s4 + $0x378] sm:$0xff]
      %v726 = vld [vmem:[%s4 + $0x380] sm:$0xff]
      %v727 = vld [vmem:[%s4 + $0x388] sm:$0xff]
      %v728 = vld [vmem:[%s4 + $0x390] sm:$0xff]
      %v729 = vld [vmem:[%s4 + $0x398] sm:$0xff]
      %v730 = vld [vmem:[%s4 + $0x3a0] sm:$0xff]
      %v731 = vld [vmem:[%s4 + $0x3a8] sm:$0xff]
      %v732 = vld [vmem:[%s4 + $0x3b0] sm:$0xff]
      %v733 = vld [vmem:[%s4 + $0x3b8] sm:$0xff]
      %v734 = vld [vmem:[%s4 + $0x3c0] sm:$0xff]
      %v735 = vld [vmem:[%s4 + $0x3c8] sm:$0xff]
      %v736 = vld [vmem:[%s4 + $0x3d0] sm:$0xff]
      %v737 = vld [vmem:[%s4 + $0x3d8] sm:$0xff]
      %v738 = vld [vmem:[%s4 + $0x3e0] sm:$0xff]
      %v739 = vld [vmem:[%s4 + $0x3e8] sm:$0xff]
      %v740 = vld [vmem:[%s4 + $0x3f0] sm:$0xff]
      %v741 = vld [vmem:[%s4 + $0x3f8] sm:$0xff]
      %v742 = vld [vmem:[%s4 + $0x400] sm:$0xff]
      %v743 = vld [vmem:[%s4 + $0x408] sm:$0xff]
      %v744 = vld [vmem:[%s4 + $0x410] sm:$0xff]
      %v745 = vld [vmem:[%s4 + $0x418] sm:$0xff]
      %v746 = vld [vmem:[%s4 + $0x420] sm:$0xff]
      %v747 = vld [vmem:[%s4 + $0x428] sm:$0xff]
      %v748 = vld [vmem:[%s4 + $0x430] sm:$0xff]
      %v749 = vld [vmem:[%s4 + $0x438] sm:$0xff]
      %v750 = vld [vmem:[%s4 + $0x440] sm:$0xff]
      %v751 = vld [vmem:[%s4 + $0x448] sm:$0xff]
      %v752 = vld [vmem:[%s4 + $0x450] sm:$0xff]
      %v753 = vld [vmem:[%s4 + $0x458] sm:$0xff]
      %v754 = vld [vmem:[%s4 + $0x460] sm:$0xff]
      %v755 = vld [vmem:[%s4 + $0x468] sm:$0xff]
      %v756 = vld [vmem:[%s4 + $0x470] sm:$0xff]
      %v757 = vld [vmem:[%s4 + $0x478] sm:$0xff]
      %758 = vmatprep.subr.mxu0 0.0
      %759 = vmatpush1.msra.mxu0 %v629
      %760 = vmatprep.subr.mxu0 0.0
      %761 = vmatpush1.msra.mxu0 %v628
      %762 = vmatprep.subr.mxu0 0.0
      %763 = vmatpush1.msra.mxu0 %v627
      %764 = vmatprep.subr.mxu0 0.0
      %765 = vmatpush1.msra.mxu0 %v626
      %766 = vmatprep.subr.mxu0 0.0
      %767 = vmatpush1.msra.mxu0 %v625
      %768 = vmatprep.subr.mxu0 0.0
      %769 = vmatpush1.msra.mxu0 %v624
      %770 = vmatprep.subr.mxu0 0.0
      %771 = vmatpush1.msra.mxu0 %v623
      %772 = vmatprep.subr.mxu0 0.0
      %773 = vmatpush1.msra.mxu0 %v622
      %774 = vmatprep.subr.mxu0 0.0
      %775 = vmatpush1.msra.mxu0 %v621
      %776 = vmatprep.subr.mxu0 0.0
      %777 = vmatpush1.msra.mxu0 %v620
      %778 = vmatprep.subr.mxu0 0.0
      %779 = vmatpush1.msra.mxu0 %v619
      %780 = vmatprep.subr.mxu0 0.0
      %781 = vmatpush1.msra.mxu0 %v618
      %782 = vmatprep.subr.mxu0 0.0
      %783 = vmatpush1.msra.mxu0 %v617
      %784 = vmatprep.subr.mxu0 0.0
      %785 = vmatpush1.msra.mxu0 %v616
      %786 = vmatprep.subr.mxu0 0.0
      %787 = vmatpush1.msra.mxu0 %v615
      %788 = vmatprep.subr.mxu0 0.0
      %789 = vmatpush1.msra.mxu0 %v614
      %790 = vmatprep.subr.mxu0 0.0
      %791 = vmatpush2.msra.mxu0 %v645
      %792 = vmatprep.subr.mxu0 0.0
      %793 = vmatpush2.msra.mxu0 %v644
      %794 = vmatprep.subr.mxu0 0.0
      %795 = vmatpush2.msra.mxu0 %v643
      %796 = vmatprep.subr.mxu0 0.0
      %797 = vmatpush2.msra.mxu0 %v642
      %798 = vmatprep.subr.mxu0 0.0
      %799 = vmatpush2.msra.mxu0 %v641
      %800 = vmatprep.subr.mxu0 0.0
      %801 = vmatpush2.msra.mxu0 %v640
      %802 = vmatprep.subr.mxu0 0.0
      %803 = vmatpush2.msra.mxu0 %v639
      %804 = vmatprep.subr.mxu0 0.0
      %805 = vmatpush2.msra.mxu0 %v638
      %806 = vmatprep.subr.mxu0 0.0
      %807 = vmatpush2.msra.mxu0 %v637
      %808 = vmatprep.subr.mxu0 0.0
      %809 = vmatpush2.msra.mxu0 %v636
      %810 = vmatprep.subr.mxu0 0.0
      %811 = vmatpush2.msra.mxu0 %v635
      %812 = vmatprep.subr.mxu0 0.0
      %813 = vmatpush2.msra.mxu0 %v634
      %814 = vmatprep.subr.mxu0 0.0
      %815 = vmatpush2.msra.mxu0 %v633
      %816 = vmatprep.subr.mxu0 0.0
      %817 = vmatpush2.msra.mxu0 %v632
      %818 = vmatprep.subr.mxu0 0.0
      %819 = vmatpush2.msra.mxu0 %v631
      %820 = vmatprep.subr.mxu0 0.0
      %821 = vmatpush2.msra.mxu0 %v630
      %822 = vmatprep.mubr.f32.mxu0 %v469
      %823 = vmatmul.mubr.f32.gmra.mxu0 %v412
      %v824 = vpop.f32.mrf.mxu0
      %v825 = vadd.f32 0.0, %v824
      %v826 = vpop.f32.mrf.mxu0
      %827 = vmatprep.mubr.f32.mxu0 %v471
      %828 = vmatmul.mubr.f32.gmra.mxu0 %v413
      %v829 = vpop.f32.mrf.mxu0
      %v830 = vadd.f32 0.0, %v829
      %v831 = vpop.f32.mrf.mxu0
      %832 = vmatprep.mubr.f32.mxu0 %v474
      %833 = vmatmul.mubr.f32.gmra.mxu0 %v415
      %v834 = vpop.f32.mrf.mxu0
      %v835 = vadd.f32 0.0, %v834
      %v836 = vpop.f32.mrf.mxu0
      %837 = vmatprep.mubr.f32.mxu0 %v476
      %838 = vmatmul.mubr.f32.gmra.mxu0 %v416
      %v839 = vpop.f32.mrf.mxu0
      %v840 = vadd.f32 0.0, %v839
      %v841 = vpop.f32.mrf.mxu0
      %842 = vmatprep.mubr.f32.mxu0 %v479
      %843 = vmatmul.mubr.f32.gmra.mxu0 %v418
      %v844 = vpop.f32.mrf.mxu0
      %v845 = vadd.f32 0.0, %v844
      %v846 = vpop.f32.mrf.mxu0
      %847 = vmatprep.mubr.f32.mxu0 %v481
      %848 = vmatmul.mubr.f32.gmra.mxu0 %v419
      %v849 = vpop.f32.mrf.mxu0
      %v850 = vadd.f32 0.0, %v849
      %v851 = vpop.f32.mrf.mxu0
      %852 = vmatprep.mubr.f32.mxu0 %v484
      %853 = vmatmul.mubr.f32.gmra.mxu0 %v421
      %v854 = vpop.f32.mrf.mxu0
      %v855 = vadd.f32 0.0, %v854
      %v856 = vpop.f32.mrf.mxu0
      %857 = vmatprep.mubr.f32.mxu0 %v486
      %858 = vmatmul.mubr.f32.gmra.mxu0 %v422
      %v859 = vpop.f32.mrf.mxu0
      %v860 = vadd.f32 0.0, %v859
      %v861 = vpop.f32.mrf.mxu0
      %862 = vmatprep.mubr.f32.mxu0 %v489
      %863 = vmatmul.mubr.f32.gmra.mxu0 %v424
      %v864 = vpop.f32.mrf.mxu0
      %v865 = vadd.f32 0.0, %v864
      %v866 = vpop.f32.mrf.mxu0
      %867 = vmatprep.mubr.f32.mxu0 %v491
      %868 = vmatmul.mubr.f32.gmra.mxu0 %v425
      %v869 = vpop.f32.mrf.mxu0
      %v870 = vadd.f32 0.0, %v869
      %v871 = vpop.f32.mrf.mxu0
      %872 = vmatprep.mubr.f32.mxu0 %v494
      %873 = vmatmul.mubr.f32.gmra.mxu0 %v427
      %v874 = vpop.f32.mrf.mxu0
      %v875 = vadd.f32 0.0, %v874
      %v876 = vpop.f32.mrf.mxu0
      %877 = vmatprep.mubr.f32.mxu0 %v496
      %878 = vmatmul.mubr.f32.gmra.mxu0 %v428
      %v879 = vpop.f32.mrf.mxu0
      %v880 = vadd.f32 0.0, %v879
      %v881 = vpop.f32.mrf.mxu0
      %882 = vmatprep.mubr.f32.mxu0 %v499
      %883 = vmatmul.mubr.f32.gmra.mxu0 %v430
      %v884 = vpop.f32.mrf.mxu0
      %v885 = vadd.f32 0.0, %v884
      %v886 = vpop.f32.mrf.mxu0
      %887 = vmatprep.mubr.f32.mxu0 %v501
      %888 = vmatmul.mubr.f32.gmra.mxu0 %v431
      %v889 = vpop.f32.mrf.mxu0
      %v890 = vadd.f32 0.0, %v889
      %v891 = vpop.f32.mrf.mxu0
      %892 = vmatprep.mubr.f32.mxu0 %v504
      %893 = vmatmul.mubr.f32.gmra.mxu0 %v433
      %v894 = vpop.f32.mrf.mxu0
      %v895 = vadd.f32 0.0, %v894
      %v896 = vpop.f32.mrf.mxu0
      %897 = vmatprep.mubr.f32.mxu0 %v506
      %898 = vmatmul.mubr.f32.gmra.mxu0 %v434
      %v899 = vpop.f32.mrf.mxu0
      %v900 = vadd.f32 0.0, %v899
      %v901 = vpop.f32.mrf.mxu0
      %902 = vdwg.mxu0
      %903 = vmatprep.subr.mxu0 0.0
      %904 = vmatpush1.msra.mxu0 %v661
      %905 = vmatprep.subr.mxu0 0.0
      %906 = vmatpush1.msra.mxu0 %v660
      %907 = vmatprep.subr.mxu0 0.0
      %908 = vmatpush1.msra.mxu0 %v659
      %909 = vmatprep.subr.mxu0 0.0
      %910 = vmatpush1.msra.mxu0 %v658
      %911 = vmatprep.subr.mxu0 0.0
      %912 = vmatpush1.msra.mxu0 %v657
      %913 = vmatprep.subr.mxu0 0.0
      %914 = vmatpush1.msra.mxu0 %v656
      %915 = vmatprep.subr.mxu0 0.0
      %916 = vmatpush1.msra.mxu0 %v655
      %917 = vmatprep.subr.mxu0 0.0
      %918 = vmatpush1.msra.mxu0 %v654
      %919 = vmatprep.subr.mxu0 0.0
      %920 = vmatpush1.msra.mxu0 %v653
      %921 = vmatprep.subr.mxu0 0.0
      %922 = vmatpush1.msra.mxu0 %v652
      %923 = vmatprep.subr.mxu0 0.0
      %924 = vmatpush1.msra.mxu0 %v651
      %925 = vmatprep.subr.mxu0 0.0
      %926 = vmatpush1.msra.mxu0 %v650
      %927 = vmatprep.subr.mxu0 0.0
      %928 = vmatpush1.msra.mxu0 %v649
      %929 = vmatprep.subr.mxu0 0.0
      %930 = vmatpush1.msra.mxu0 %v648
      %931 = vmatprep.subr.mxu0 0.0
      %932 = vmatpush1.msra.mxu0 %v647
      %933 = vmatprep.subr.mxu0 0.0
      %934 = vmatpush1.msra.mxu0 %v646
      %935 = vmatprep.subr.mxu0 0.0
      %936 = vmatpush2.msra.mxu0 %v677
      %937 = vmatprep.subr.mxu0 0.0
      %938 = vmatpush2.msra.mxu0 %v676
      %939 = vmatprep.subr.mxu0 0.0
      %940 = vmatpush2.msra.mxu0 %v675
      %941 = vmatprep.subr.mxu0 0.0
      %942 = vmatpush2.msra.mxu0 %v674
      %943 = vmatprep.subr.mxu0 0.0
      %944 = vmatpush2.msra.mxu0 %v673
      %945 = vmatprep.subr.mxu0 0.0
      %946 = vmatpush2.msra.mxu0 %v672
      %947 = vmatprep.subr.mxu0 0.0
      %948 = vmatpush2.msra.mxu0 %v671
      %949 = vmatprep.subr.mxu0 0.0
      %950 = vmatpush2.msra.mxu0 %v670
      %951 = vmatprep.subr.mxu0 0.0
      %952 = vmatpush2.msra.mxu0 %v669
      %953 = vmatprep.subr.mxu0 0.0
      %954 = vmatpush2.msra.mxu0 %v668
      %955 = vmatprep.subr.mxu0 0.0
      %956 = vmatpush2.msra.mxu0 %v667
      %957 = vmatprep.subr.mxu0 0.0
      %958 = vmatpush2.msra.mxu0 %v666
      %959 = vmatprep.subr.mxu0 0.0
      %960 = vmatpush2.msra.mxu0 %v665
      %961 = vmatprep.subr.mxu0 0.0
      %962 = vmatpush2.msra.mxu0 %v664
      %963 = vmatprep.subr.mxu0 0.0
      %964 = vmatpush2.msra.mxu0 %v663
      %965 = vmatprep.subr.mxu0 0.0
      %966 = vmatpush2.msra.mxu0 %v662
      %967 = vmatprep.mubr.f32.mxu0 %v415
      %968 = vmatmul.mubr.f32.gmra.mxu0 %v526
      %v969 = vpop.f32.mrf.mxu0
      %v970 = vadd.f32 %v825, %v969
      %v971 = vpop.f32.mrf.mxu0
      %972 = vmatprep.mubr.f32.mxu0 %v416
      %973 = vmatmul.mubr.f32.gmra.mxu0 %v528
      %v974 = vpop.f32.mrf.mxu0
      %v975 = vadd.f32 %v830, %v974
      %v976 = vpop.f32.mrf.mxu0
      %977 = vmatprep.mubr.f32.mxu0 %v418
      %978 = vmatmul.mubr.f32.gmra.mxu0 %v531
      %v979 = vpop.f32.mrf.mxu0
      %v980 = vadd.f32 %v835, %v979
      %v981 = vpop.f32.mrf.mxu0
      %982 = vmatprep.mubr.f32.mxu0 %v419
      %983 = vmatmul.mubr.f32.gmra.mxu0 %v533
      %v984 = vpop.f32.mrf.mxu0
      %v985 = vadd.f32 %v840, %v984
      %v986 = vpop.f32.mrf.mxu0
      %987 = vmatprep.mubr.f32.mxu0 %v421
      %988 = vmatmul.mubr.f32.gmra.mxu0 %v536
      %v989 = vpop.f32.mrf.mxu0
      %v990 = vadd.f32 %v845, %v989
      %v991 = vpop.f32.mrf.mxu0
      %992 = vmatprep.mubr.f32.mxu0 %v422
      %993 = vmatmul.mubr.f32.gmra.mxu0 %v538
      %v994 = vpop.f32.mrf.mxu0
      %v995 = vadd.f32 %v850, %v994
      %v996 = vpop.f32.mrf.mxu0
      %997 = vmatprep.mubr.f32.mxu0 %v424
      %998 = vmatmul.mubr.f32.gmra.mxu0 %v541
      %v999 = vpop.f32.mrf.mxu0
      %v1000 = vadd.f32 %v855, %v999
      %v1001 = vpop.f32.mrf.mxu0
      %1002 = vmatprep.mubr.f32.mxu0 %v425
      %1003 = vmatmul.mubr.f32.gmra.mxu0 %v543
      %v1004 = vpop.f32.mrf.mxu0
      %v1005 = vadd.f32 %v860, %v1004
      %v1006 = vpop.f32.mrf.mxu0
      %1007 = vmatprep.mubr.f32.mxu0 %v427
      %1008 = vmatmul.mubr.f32.gmra.mxu0 %v546
      %v1009 = vpop.f32.mrf.mxu0
      %v1010 = vadd.f32 %v865, %v1009
      %v1011 = vpop.f32.mrf.mxu0
      %1012 = vmatprep.mubr.f32.mxu0 %v428
      %1013 = vmatmul.mubr.f32.gmra.mxu0 %v548
      %v1014 = vpop.f32.mrf.mxu0
      %v1015 = vadd.f32 %v870, %v1014
      %v1016 = vpop.f32.mrf.mxu0
      %1017 = vmatprep.mubr.f32.mxu0 %v430
      %1018 = vmatmul.mubr.f32.gmra.mxu0 %v551
      %v1019 = vpop.f32.mrf.mxu0
      %v1020 = vadd.f32 %v875, %v1019
      %v1021 = vpop.f32.mrf.mxu0
      %1022 = vmatprep.mubr.f32.mxu0 %v431
      %1023 = vmatmul.mubr.f32.gmra.mxu0 %v553
      %v1024 = vpop.f32.mrf.mxu0
      %v1025 = vadd.f32 %v880, %v1024
      %v1026 = vpop.f32.mrf.mxu0
      %1027 = vmatprep.mubr.f32.mxu0 %v433
      %1028 = vmatmul.mubr.f32.gmra.mxu0 %v556
      %v1029 = vpop.f32.mrf.mxu0
      %v1030 = vadd.f32 %v885, %v1029
      %v1031 = vpop.f32.mrf.mxu0
      %1032 = vmatprep.mubr.f32.mxu0 %v434
      %1033 = vmatmul.mubr.f32.gmra.mxu0 %v558
      %v1034 = vpop.f32.mrf.mxu0
      %v1035 = vadd.f32 %v890, %v1034
      %v1036 = vpop.f32.mrf.mxu0
      %1037 = vmatprep.mubr.f32.mxu0 %v436
      %1038 = vmatmul.mubr.f32.gmra.mxu0 %v561
      %v1039 = vpop.f32.mrf.mxu0
      %v1040 = vadd.f32 %v895, %v1039
      %v1041 = vpop.f32.mrf.mxu0
      %1042 = vmatprep.mubr.f32.mxu0 %v437
      %1043 = vmatmul.mubr.f32.gmra.mxu0 %v563
      %v1044 = vpop.f32.mrf.mxu0
      %v1045 = vadd.f32 %v900, %v1044
      %v1046 = vpop.f32.mrf.mxu0
      %1047 = vdwg.mxu0
      %1048 = vmatprep.subr.mxu0 0.0
      %1049 = vmatpush1.msra.mxu0 %v693
      %1050 = vmatprep.subr.mxu0 0.0
      %1051 = vmatpush1.msra.mxu0 %v692
      %1052 = vmatprep.subr.mxu0 0.0
      %1053 = vmatpush1.msra.mxu0 %v691
      %1054 = vmatprep.subr.mxu0 0.0
      %1055 = vmatpush1.msra.mxu0 %v690
      %1056 = vmatprep.subr.mxu0 0.0
      %1057 = vmatpush1.msra.mxu0 %v689
      %1058 = vmatprep.subr.mxu0 0.0
      %1059 = vmatpush1.msra.mxu0 %v688
      %1060 = vmatprep.subr.mxu0 0.0
      %1061 = vmatpush1.msra.mxu0 %v687
      %1062 = vmatprep.subr.mxu0 0.0
      %1063 = vmatpush1.msra.mxu0 %v686
      %1064 = vmatprep.subr.mxu0 0.0
      %1065 = vmatpush1.msra.mxu0 %v685
      %1066 = vmatprep.subr.mxu0 0.0
      %1067 = vmatpush1.msra.mxu0 %v684
      %1068 = vmatprep.subr.mxu0 0.0
      %1069 = vmatpush1.msra.mxu0 %v683
      %1070 = vmatprep.subr.mxu0 0.0
      %1071 = vmatpush1.msra.mxu0 %v682
      %1072 = vmatprep.subr.mxu0 0.0
      %1073 = vmatpush1.msra.mxu0 %v681
      %1074 = vmatprep.subr.mxu0 0.0
      %1075 = vmatpush1.msra.mxu0 %v680
      %1076 = vmatprep.subr.mxu0 0.0
      %1077 = vmatpush1.msra.mxu0 %v679
      %1078 = vmatprep.subr.mxu0 0.0
      %1079 = vmatpush1.msra.mxu0 %v678
      %1080 = vmatprep.subr.mxu0 0.0
      %1081 = vmatpush2.msra.mxu0 %v709
      %1082 = vmatprep.subr.mxu0 0.0
      %1083 = vmatpush2.msra.mxu0 %v708
      %1084 = vmatprep.subr.mxu0 0.0
      %1085 = vmatpush2.msra.mxu0 %v707
      %1086 = vmatprep.subr.mxu0 0.0
      %1087 = vmatpush2.msra.mxu0 %v706
      %1088 = vmatprep.subr.mxu0 0.0
      %1089 = vmatpush2.msra.mxu0 %v705
      %1090 = vmatprep.subr.mxu0 0.0
      %1091 = vmatpush2.msra.mxu0 %v704
      %1092 = vmatprep.subr.mxu0 0.0
      %1093 = vmatpush2.msra.mxu0 %v703
      %1094 = vmatprep.subr.mxu0 0.0
      %1095 = vmatpush2.msra.mxu0 %v702
      %1096 = vmatprep.subr.mxu0 0.0
      %1097 = vmatpush2.msra.mxu0 %v701
      %1098 = vmatprep.subr.mxu0 0.0
      %1099 = vmatpush2.msra.mxu0 %v700
      %1100 = vmatprep.subr.mxu0 0.0
      %1101 = vmatpush2.msra.mxu0 %v699
      %1102 = vmatprep.subr.mxu0 0.0
      %1103 = vmatpush2.msra.mxu0 %v698
      %1104 = vmatprep.subr.mxu0 0.0
      %1105 = vmatpush2.msra.mxu0 %v697
      %1106 = vmatprep.subr.mxu0 0.0
      %1107 = vmatpush2.msra.mxu0 %v696
      %1108 = vmatprep.subr.mxu0 0.0
      %1109 = vmatpush2.msra.mxu0 %v695
      %1110 = vmatprep.subr.mxu0 0.0
      %1111 = vmatpush2.msra.mxu0 %v694
      %1112 = vmatprep.mubr.f32.mxu0 %v531
      %1113 = vmatmul.mubr.f32.gmra.mxu0 %v474
      %v1114 = vpop.f32.mrf.mxu0
      %v1115 = vadd.f32 %v970, %v1114
      %v1116 = vpop.f32.mrf.mxu0
      %1117 = vmatprep.mubr.f32.mxu0 %v533
      %1118 = vmatmul.mubr.f32.gmra.mxu0 %v476
      %v1119 = vpop.f32.mrf.mxu0
      %v1120 = vadd.f32 %v975, %v1119
      %v1121 = vpop.f32.mrf.mxu0
      %1122 = vmatprep.mubr.f32.mxu0 %v536
      %1123 = vmatmul.mubr.f32.gmra.mxu0 %v479
      %v1124 = vpop.f32.mrf.mxu0
      %v1125 = vadd.f32 %v980, %v1124
      %v1126 = vpop.f32.mrf.mxu0
      %1127 = vmatprep.mubr.f32.mxu0 %v538
      %1128 = vmatmul.mubr.f32.gmra.mxu0 %v481
      %v1129 = vpop.f32.mrf.mxu0
      %v1130 = vadd.f32 %v985, %v1129
      %v1131 = vpop.f32.mrf.mxu0
      %1132 = vmatprep.mubr.f32.mxu0 %v541
      %1133 = vmatmul.mubr.f32.gmra.mxu0 %v484
      %v1134 = vpop.f32.mrf.mxu0
      %v1135 = vadd.f32 %v990, %v1134
      %v1136 = vpop.f32.mrf.mxu0
      %1137 = vmatprep.mubr.f32.mxu0 %v543
      %1138 = vmatmul.mubr.f32.gmra.mxu0 %v486
      %v1139 = vpop.f32.mrf.mxu0
      %v1140 = vadd.f32 %v995, %v1139
      %v1141 = vpop.f32.mrf.mxu0
      %1142 = vmatprep.mubr.f32.mxu0 %v546
      %1143 = vmatmul.mubr.f32.gmra.mxu0 %v489
      %v1144 = vpop.f32.mrf.mxu0
      %v1145 = vadd.f32 %v1000, %v1144
      %v1146 = vpop.f32.mrf.mxu0
      %1147 = vmatprep.mubr.f32.mxu0 %v548
      %1148 = vmatmul.mubr.f32.gmra.mxu0 %v491
      %v1149 = vpop.f32.mrf.mxu0
      %v1150 = vadd.f32 %v1005, %v1149
      %v1151 = vpop.f32.mrf.mxu0
      %1152 = vmatprep.mubr.f32.mxu0 %v551
      %1153 = vmatmul.mubr.f32.gmra.mxu0 %v494
      %v1154 = vpop.f32.mrf.mxu0
      %v1155 = vadd.f32 %v1010, %v1154
      %v1156 = vpop.f32.mrf.mxu0
      %1157 = vmatprep.mubr.f32.mxu0 %v553
      %1158 = vmatmul.mubr.f32.gmra.mxu0 %v496
      %v1159 = vpop.f32.mrf.mxu0
      %v1160 = vadd.f32 %v1015, %v1159
      %v1161 = vpop.f32.mrf.mxu0
      %1162 = vmatprep.mubr.f32.mxu0 %v556
      %1163 = vmatmul.mubr.f32.gmra.mxu0 %v499
      %v1164 = vpop.f32.mrf.mxu0
      %v1165 = vadd.f32 %v1020, %v1164
      %v1166 = vpop.f32.mrf.mxu0
      %1167 = vmatprep.mubr.f32.mxu0 %v558
      %1168 = vmatmul.mubr.f32.gmra.mxu0 %v501
      %v1169 = vpop.f32.mrf.mxu0
      %v1170 = vadd.f32 %v1025, %v1169
      %v1171 = vpop.f32.mrf.mxu0
      %1172 = vmatprep.mubr.f32.mxu0 %v561
      %1173 = vmatmul.mubr.f32.gmra.mxu0 %v504
      %v1174 = vpop.f32.mrf.mxu0
      %v1175 = vadd.f32 %v1030, %v1174
      %v1176 = vpop.f32.mrf.mxu0
      %1177 = vmatprep.mubr.f32.mxu0 %v563
      %1178 = vmatmul.mubr.f32.gmra.mxu0 %v506
      %v1179 = vpop.f32.mrf.mxu0
      %v1180 = vadd.f32 %v1035, %v1179
      %v1181 = vpop.f32.mrf.mxu0
      %1182 = vmatprep.mubr.f32.mxu0 %v592
      %1183 = vmatmul.mubr.f32.gmra.mxu0 %v585
      %v1184 = vpop.f32.mrf.mxu0
      %v1185 = vadd.f32 %v1040, %v1184
      %v1186 = vpop.f32.mrf.mxu0
      %1187 = vmatprep.mubr.f32.mxu0 %v594
      %1188 = vmatmul.mubr.f32.gmra.mxu0 %v587
      %v1189 = vpop.f32.mrf.mxu0
      %v1190 = vadd.f32 %v1045, %v1189
      %v1191 = vpop.f32.mrf.mxu0
      %1192 = vdwg.mxu0
      %1193 = vmatprep.subr.mxu0 0.0
      %1194 = vmatpush1.msra.mxu0 %v725
      %1195 = vmatprep.subr.mxu0 0.0
      %1196 = vmatpush1.msra.mxu0 %v724
      %1197 = vmatprep.subr.mxu0 0.0
      %1198 = vmatpush1.msra.mxu0 %v723
      %1199 = vmatprep.subr.mxu0 0.0
      %1200 = vmatpush1.msra.mxu0 %v722
      %1201 = vmatprep.subr.mxu0 0.0
      %1202 = vmatpush1.msra.mxu0 %v721
      %1203 = vmatprep.subr.mxu0 0.0
      %1204 = vmatpush1.msra.mxu0 %v720
      %1205 = vmatprep.subr.mxu0 0.0
      %1206 = vmatpush1.msra.mxu0 %v719
      %1207 = vmatprep.subr.mxu0 0.0
      %1208 = vmatpush1.msra.mxu0 %v718
      %1209 = vmatprep.subr.mxu0 0.0
      %1210 = vmatpush1.msra.mxu0 %v717
      %1211 = vmatprep.subr.mxu0 0.0
      %1212 = vmatpush1.msra.mxu0 %v716
      %1213 = vmatprep.subr.mxu0 0.0
      %1214 = vmatpush1.msra.mxu0 %v715
      %1215 = vmatprep.subr.mxu0 0.0
      %1216 = vmatpush1.msra.mxu0 %v714
      %1217 = vmatprep.subr.mxu0 0.0
      %1218 = vmatpush1.msra.mxu0 %v713
      %1219 = vmatprep.subr.mxu0 0.0
      %1220 = vmatpush1.msra.mxu0 %v712
      %1221 = vmatprep.subr.mxu0 0.0
      %1222 = vmatpush1.msra.mxu0 %v711
      %1223 = vmatprep.subr.mxu0 0.0
      %1224 = vmatpush1.msra.mxu0 %v710
      %1225 = vmatprep.subr.mxu0 0.0
      %1226 = vmatpush2.msra.mxu0 %v741
      %1227 = vmatprep.subr.mxu0 0.0
      %1228 = vmatpush2.msra.mxu0 %v740
      %1229 = vmatprep.subr.mxu0 0.0
      %1230 = vmatpush2.msra.mxu0 %v739
      %1231 = vmatprep.subr.mxu0 0.0
      %1232 = vmatpush2.msra.mxu0 %v738
      %1233 = vmatprep.subr.mxu0 0.0
      %1234 = vmatpush2.msra.mxu0 %v737
      %1235 = vmatprep.subr.mxu0 0.0
      %1236 = vmatpush2.msra.mxu0 %v736
      %1237 = vmatprep.subr.mxu0 0.0
      %1238 = vmatpush2.msra.mxu0 %v735
      %1239 = vmatprep.subr.mxu0 0.0
      %1240 = vmatpush2.msra.mxu0 %v734
      %1241 = vmatprep.subr.mxu0 0.0
      %1242 = vmatpush2.msra.mxu0 %v733
      %1243 = vmatprep.subr.mxu0 0.0
      %1244 = vmatpush2.msra.mxu0 %v732
      %1245 = vmatprep.subr.mxu0 0.0
      %1246 = vmatpush2.msra.mxu0 %v731
      %1247 = vmatprep.subr.mxu0 0.0
      %1248 = vmatpush2.msra.mxu0 %v730
      %1249 = vmatprep.subr.mxu0 0.0
      %1250 = vmatpush2.msra.mxu0 %v729
      %1251 = vmatprep.subr.mxu0 0.0
      %1252 = vmatpush2.msra.mxu0 %v728
      %1253 = vmatprep.subr.mxu0 0.0
      %1254 = vmatpush2.msra.mxu0 %v727
      %1255 = vmatprep.subr.mxu0 0.0
      %1256 = vmatpush2.msra.mxu0 %v726
      %1257 = vmatprep.mubr.f32.mxu0 %v479
      %1258 = vmatmul.mubr.f32.gmra.mxu0 %v418
      %v1259 = vpop.f32.mrf.mxu0
      %v1260 = vadd.f32 %v1115, %v1259
      %v1261 = vpop.f32.mrf.mxu0
      %1262 = vmatprep.mubr.f32.mxu0 %v481
      %1263 = vmatmul.mubr.f32.gmra.mxu0 %v419
      %v1264 = vpop.f32.mrf.mxu0
      %v1265 = vadd.f32 %v1120, %v1264
      %v1266 = vpop.f32.mrf.mxu0
      %1267 = vmatprep.mubr.f32.mxu0 %v484
      %1268 = vmatmul.mubr.f32.gmra.mxu0 %v421
      %v1269 = vpop.f32.mrf.mxu0
      %v1270 = vadd.f32 %v1125, %v1269
      %v1271 = vpop.f32.mrf.mxu0
      %1272 = vmatprep.mubr.f32.mxu0 %v486
      %1273 = vmatmul.mubr.f32.gmra.mxu0 %v422
      %v1274 = vpop.f32.mrf.mxu0
      %v1275 = vadd.f32 %v1130, %v1274
      %v1276 = vpop.f32.mrf.mxu0
      %1277 = vmatprep.mubr.f32.mxu0 %v489
      %1278 = vmatmul.mubr.f32.gmra.mxu0 %v424
      %v1279 = vpop.f32.mrf.mxu0
      %v1280 = vadd.f32 %v1135, %v1279
      %v1281 = vpop.f32.mrf.mxu0
      %1282 = vmatprep.mubr.f32.mxu0 %v491
      %1283 = vmatmul.mubr.f32.gmra.mxu0 %v425
      %v1284 = vpop.f32.mrf.mxu0
      %v1285 = vadd.f32 %v1140, %v1284
      %v1286 = vpop.f32.mrf.mxu0
      %1287 = vmatprep.mubr.f32.mxu0 %v494
      %1288 = vmatmul.mubr.f32.gmra.mxu0 %v427
      %v1289 = vpop.f32.mrf.mxu0
      %v1290 = vadd.f32 %v1145, %v1289
      %v1291 = vpop.f32.mrf.mxu0
      %1292 = vmatprep.mubr.f32.mxu0 %v496
      %1293 = vmatmul.mubr.f32.gmra.mxu0 %v428
      %v1294 = vpop.f32.mrf.mxu0
      %v1295 = vadd.f32 %v1150, %v1294
      %v1296 = vpop.f32.mrf.mxu0
      %1297 = vmatprep.mubr.f32.mxu0 %v499
      %1298 = vmatmul.mubr.f32.gmra.mxu0 %v430
      %v1299 = vpop.f32.mrf.mxu0
      %v1300 = vadd.f32 %v1155, %v1299
      %v1301 = vpop.f32.mrf.mxu0
      %1302 = vmatprep.mubr.f32.mxu0 %v501
      %1303 = vmatmul.mubr.f32.gmra.mxu0 %v431
      %v1304 = vpop.f32.mrf.mxu0
      %v1305 = vadd.f32 %v1160, %v1304
      %v1306 = vpop.f32.mrf.mxu0
      %1307 = vmatprep.mubr.f32.mxu0 %v504
      %1308 = vmatmul.mubr.f32.gmra.mxu0 %v433
      %v1309 = vpop.f32.mrf.mxu0
      %v1310 = vadd.f32 %v1165, %v1309
      %v1311 = vpop.f32.mrf.mxu0
      %1312 = vmatprep.mubr.f32.mxu0 %v506
      %1313 = vmatmul.mubr.f32.gmra.mxu0 %v434
      %v1314 = vpop.f32.mrf.mxu0
      %v1315 = vadd.f32 %v1170, %v1314
      %v1316 = vpop.f32.mrf.mxu0
      %1317 = vmatprep.mubr.f32.mxu0 %v585
      %1318 = vmatmul.mubr.f32.gmra.mxu0 %v436
      %v1319 = vpop.f32.mrf.mxu0
      %v1320 = vadd.f32 %v1175, %v1319
      %v1321 = vpop.f32.mrf.mxu0
      %1322 = vmatprep.mubr.f32.mxu0 %v587
      %1323 = vmatmul.mubr.f32.gmra.mxu0 %v437
      %v1324 = vpop.f32.mrf.mxu0
      %v1325 = vadd.f32 %v1180, %v1324
      %v1326 = vpop.f32.mrf.mxu0
      %1327 = vmatprep.mubr.f32.mxu0 %v602
      %1328 = vmatmul.mubr.f32.gmra.mxu0 %v439
      %v1329 = vpop.f32.mrf.mxu0
      %v1330 = vadd.f32 %v1185, %v1329
      %v1331 = vpop.f32.mrf.mxu0
      %1332 = vmatprep.mubr.f32.mxu0 %v604
      %1333 = vmatmul.mubr.f32.gmra.mxu0 %v440
      %v1334 = vpop.f32.mrf.mxu0
      %v1335 = vadd.f32 %v1190, %v1334
      %v1336 = vpop.f32.mrf.mxu0
      %1337 = vdwg.mxu0
      %1338 = vmatprep.subr.mxu0 0.0
      %1339 = vmatpush1.msra.mxu0 %v757
      %1340 = vmatprep.subr.mxu0 0.0
      %1341 = vmatpush1.msra.mxu0 %v756
      %1342 = vmatprep.subr.mxu0 0.0
      %1343 = vmatpush1.msra.mxu0 %v755
      %1344 = vmatprep.subr.mxu0 0.0
      %1345 = vmatpush1.msra.mxu0 %v754
      %1346 = vmatprep.subr.mxu0 0.0
      %1347 = vmatpush1.msra.mxu0 %v753
      %1348 = vmatprep.subr.mxu0 0.0
      %1349 = vmatpush1.msra.mxu0 %v752
      %1350 = vmatprep.subr.mxu0 0.0
      %1351 = vmatpush1.msra.mxu0 %v751
      %1352 = vmatprep.subr.mxu0 0.0
      %1353 = vmatpush1.msra.mxu0 %v750
      %1354 = vmatprep.subr.mxu0 0.0
      %1355 = vmatpush1.msra.mxu0 %v749
      %1356 = vmatprep.subr.mxu0 0.0
      %1357 = vmatpush1.msra.mxu0 %v748
      %1358 = vmatprep.subr.mxu0 0.0
      %1359 = vmatpush1.msra.mxu0 %v747
      %1360 = vmatprep.subr.mxu0 0.0
      %1361 = vmatpush1.msra.mxu0 %v746
      %1362 = vmatprep.subr.mxu0 0.0
      %1363 = vmatpush1.msra.mxu0 %v745
      %1364 = vmatprep.subr.mxu0 0.0
      %1365 = vmatpush1.msra.mxu0 %v744
      %1366 = vmatprep.subr.mxu0 0.0
      %1367 = vmatpush1.msra.mxu0 %v743
      %1368 = vmatprep.subr.mxu0 0.0
      %1369 = vmatpush1.msra.mxu0 %v742
      %1370 = vmatprep.subr.mxu0 0.0
      %1371 = vmatpush2.msra.mxu0 0.0
      %1372 = vmatprep.subr.mxu0 0.0
      %1373 = vmatpush2.msra.mxu0 0.0
      %1374 = vmatprep.subr.mxu0 0.0
      %1375 = vmatpush2.msra.mxu0 0.0
      %1376 = vmatprep.subr.mxu0 0.0
      %1377 = vmatpush2.msra.mxu0 0.0
      %1378 = vmatprep.subr.mxu0 0.0
      %1379 = vmatpush2.msra.mxu0 0.0
      %1380 = vmatprep.subr.mxu0 0.0
      %1381 = vmatpush2.msra.mxu0 0.0
      %1382 = vmatprep.subr.mxu0 0.0
      %1383 = vmatpush2.msra.mxu0 0.0
      %1384 = vmatprep.subr.mxu0 0.0
      %1385 = vmatpush2.msra.mxu0 0.0
      %1386 = vmatprep.subr.mxu0 0.0
      %1387 = vmatpush2.msra.mxu0 0.0
      %1388 = vmatprep.subr.mxu0 0.0
      %1389 = vmatpush2.msra.mxu0 0.0
      %1390 = vmatprep.subr.mxu0 0.0
      %1391 = vmatpush2.msra.mxu0 0.0
      %1392 = vmatprep.subr.mxu0 0.0
      %1393 = vmatpush2.msra.mxu0 0.0
      %1394 = vmatprep.subr.mxu0 0.0
      %1395 = vmatpush2.msra.mxu0 0.0
      %1396 = vmatprep.subr.mxu0 0.0
      %1397 = vmatpush2.msra.mxu0 0.0
      %1398 = vmatprep.subr.mxu0 0.0
      %1399 = vmatpush2.msra.mxu0 0.0
      %1400 = vmatprep.subr.mxu0 0.0
      %1401 = vmatpush2.msra.mxu0 0.0
      %1402 = vmatprep.mubr.f32.mxu0 0.0
      %1403 = vmatmul.mubr.f32.gmra.mxu0 %v536
      %v1404 = vpop.f32.mrf.mxu0
      %v1405 = vadd.f32 %v1260, %v1404
      %v1406 = vpop.f32.mrf.mxu0
      %1407 = vmatprep.mubr.f32.mxu0 0.0
      %1408 = vmatmul.mubr.f32.gmra.mxu0 %v538
      %v1409 = vpop.f32.mrf.mxu0
      %v1410 = vadd.f32 %v1265, %v1409
      %v1411 = vpop.f32.mrf.mxu0
      %1412 = vmatprep.mubr.f32.mxu0 0.0
      %1413 = vmatmul.mubr.f32.gmra.mxu0 %v541
      %v1414 = vpop.f32.mrf.mxu0
      %v1415 = vadd.f32 %v1270, %v1414
      %v1416 = vpop.f32.mrf.mxu0
      %1417 = vmatprep.mubr.f32.mxu0 0.0
      %1418 = vmatmul.mubr.f32.gmra.mxu0 %v543
      %v1419 = vpop.f32.mrf.mxu0
      %v1420 = vadd.f32 %v1275, %v1419
      %v1421 = vpop.f32.mrf.mxu0
      %1422 = vmatprep.mubr.f32.mxu0 0.0
      %1423 = vmatmul.mubr.f32.gmra.mxu0 %v546
      %v1424 = vpop.f32.mrf.mxu0
      %v1425 = vadd.f32 %v1280, %v1424
      %v1426 = vpop.f32.mrf.mxu0
      %1427 = vmatprep.mubr.f32.mxu0 0.0
      %1428 = vmatmul.mubr.f32.gmra.mxu0 %v548
      %v1429 = vpop.f32.mrf.mxu0
      %v1430 = vadd.f32 %v1285, %v1429
      %v1431 = vpop.f32.mrf.mxu0
      %1432 = vmatprep.mubr.f32.mxu0 0.0
      %1433 = vmatmul.mubr.f32.gmra.mxu0 %v551
      %v1434 = vpop.f32.mrf.mxu0
      %v1435 = vadd.f32 %v1290, %v1434
      %v1436 = vpop.f32.mrf.mxu0
      %1437 = vmatprep.mubr.f32.mxu0 0.0
      %1438 = vmatmul.mubr.f32.gmra.mxu0 %v553
      %v1439 = vpop.f32.mrf.mxu0
      %v1440 = vadd.f32 %v1295, %v1439
      %v1441 = vpop.f32.mrf.mxu0
      %1442 = vmatprep.mubr.f32.mxu0 0.0
      %1443 = vmatmul.mubr.f32.gmra.mxu0 %v556
      %v1444 = vpop.f32.mrf.mxu0
      %v1445 = vadd.f32 %v1300, %v1444
      %v1446 = vpop.f32.mrf.mxu0
      %1447 = vmatprep.mubr.f32.mxu0 0.0
      %1448 = vmatmul.mubr.f32.gmra.mxu0 %v558
      %v1449 = vpop.f32.mrf.mxu0
      %v1450 = vadd.f32 %v1305, %v1449
      %v1451 = vpop.f32.mrf.mxu0
      %1452 = vmatprep.mubr.f32.mxu0 0.0
      %1453 = vmatmul.mubr.f32.gmra.mxu0 %v561
      %v1454 = vpop.f32.mrf.mxu0
      %v1455 = vadd.f32 %v1310, %v1454
      %v1456 = vpop.f32.mrf.mxu0
      %1457 = vmatprep.mubr.f32.mxu0 0.0
      %1458 = vmatmul.mubr.f32.gmra.mxu0 %v563
      %v1459 = vpop.f32.mrf.mxu0
      %v1460 = vadd.f32 %v1315, %v1459
      %v1461 = vpop.f32.mrf.mxu0
      %1462 = vmatprep.mubr.f32.mxu0 0.0
      %1463 = vmatmul.mubr.f32.gmra.mxu0 %v592
      %v1464 = vpop.f32.mrf.mxu0
      %v1465 = vadd.f32 %v1320, %v1464
      %v1466 = vpop.f32.mrf.mxu0
      %1467 = vmatprep.mubr.f32.mxu0 0.0
      %1468 = vmatmul.mubr.f32.gmra.mxu0 %v594
      %v1469 = vpop.f32.mrf.mxu0
      %v1470 = vadd.f32 %v1325, %v1469
      %v1471 = vpop.f32.mrf.mxu0
      %1472 = vmatprep.mubr.f32.mxu0 0.0
      %1473 = vmatmul.mubr.f32.gmra.mxu0 %v609
      %v1474 = vpop.f32.mrf.mxu0
      %v1475 = vadd.f32 %v1330, %v1474
      %v1476 = vpop.f32.mrf.mxu0
      %1477 = vmatprep.mubr.f32.mxu0 0.0
      %1478 = vmatmul.mubr.f32.gmra.mxu0 %v611
      %v1479 = vpop.f32.mrf.mxu0
      %v1480 = vadd.f32 %v1335, %v1479
      %v1481 = vpop.f32.mrf.mxu0
      %1482 = vdwg.mxu0
      %v1483 = vld [vmem:[%s327] sm:$0x1]
      %v1485 = vlaneseq
      %v1486 = vshrl.u32 %v1485, 7
      %v1487 = vsub.s32 0, %v1486
      %v1488 = vrot.slane %v1483, %v1487
      %v1490 = vmul.f32 %v1405, %v1488
      %v1491 = vmul.f32 %v1410, %v1488
      %v1492 = vmul.f32 %v1415, %v1488
      %v1493 = vmul.f32 %v1420, %v1488
      %v1494 = vmul.f32 %v1425, %v1488
      %v1495 = vmul.f32 %v1430, %v1488
      %v1496 = vmul.f32 %v1435, %v1488
      %v1497 = vmul.f32 %v1440, %v1488
      %v1498 = vmul.f32 %v1445, %v1488
      %v1499 = vmul.f32 %v1450, %v1488
      %v1500 = vmul.f32 %v1455, %v1488
      %v1501 = vmul.f32 %v1460, %v1488
      %v1502 = vmul.f32 %v1465, %v1488
      %v1503 = vmul.f32 %v1470, %v1488
      %v1504 = vmul.f32 %v1475, %v1488
      %v1505 = vmul.f32 %v1480, %v1488
      %1506 = vst [vmem:[%s373] sm:$0xff] %v1490
      %1507 = vst [vmem:[%s373 + $0x8] sm:$0xff] %v1491
      %1508 = vst [vmem:[%s373 + $0x10] sm:$0xff] %v1492
      %1509 = vst [vmem:[%s373 + $0x18] sm:$0xff] %v1493
      %1510 = vst [vmem:[%s373 + $0x20] sm:$0xff] %v1494
      %1511 = vst [vmem:[%s373 + $0x28] sm:$0xff] %v1495
      %1512 = vst [vmem:[%s373 + $0x30] sm:$0xff] %v1496
      %1513 = vst [vmem:[%s373 + $0x38] sm:$0xff] %v1497
      %1514 = vst [vmem:[%s373 + $0x40] sm:$0xff] %v1498
      %1515 = vst [vmem:[%s373 + $0x48] sm:$0xff] %v1499
      %1516 = vst [vmem:[%s373 + $0x50] sm:$0xff] %v1500
      %1517 = vst [vmem:[%s373 + $0x58] sm:$0xff] %v1501
      %1518 = vst [vmem:[%s373 + $0x60] sm:$0xff] %v1502
      %1519 = vst [vmem:[%s373 + $0x68] sm:$0xff] %v1503
      %1520 = vst [vmem:[%s373 + $0x70] sm:$0xff] %v1504
      %1521 = vst [vmem:[%s373 + $0x78] sm:$0xff] %v1505
      %s1522 = smul.u32 8, %s21
      %p1523 = scmp.lt.s32.totalorder %s20, 1
      %s1524 = scalar_select %p1523, %s20, 1
      %p1525 = scmp.lt.s32.totalorder %s1522, 15
      %s1526 = scalar_select %p1525, %s1522, 15
      %s1527 = smul.addr %s1526, 2
      %s1528 = smul.addr %s1524, 32
      %s1529 = sadd.s32 %s1527, %s1528
      %s1530 = smul.addr %s1529, 8
      %s1531 = scalar_lea.vmem %s5, %s1530
      // Predicated region
      $region41: #{conv2d_weight_modulate.1} parent=39 // pred_check
        %p1532 = pneg %p181
      $region42: #{conv2d_weight_modulate.1} parent=39 // pred_check_branch
        %1534 = sbr.rel (%p1532) target = $region44
      $region43: #{conv2d_weight_modulate.1} parent=39 // pred_region
        %s1535 = smul.u32 8, %s21
      $region44: #{conv2d_weight_modulate.1} parent=39 // pred_fallthru
        _
    $region40: #{conv2d_weight_modulate.1} parent=5 // pred_fallthru
      _
    %p1536 = scmp.le.s32.totalorder 2, %s11
    // Predicated region
    $region45: #{conv2d_weight_modulate.1} parent=5 // pred_check
      %p1537 = pneg %p1536
    $region46: #{conv2d_weight_modulate.1} parent=5 // pred_check_branch
      %1539 = sbr.rel (%p1537) target = $region48
    $region47: #{conv2d_weight_modulate.1} parent=5 // pred_region
      %s1540 = ssub.s32 %s11, 2
      // Predicated region
      $region49: #{conv2d_weight_modulate.1} parent=47 // pred_check
        %p1541 = pneg %p187
      $region50: #{conv2d_weight_modulate.1} parent=47 // pred_check_branch
        %1543 = sbr.rel (%p1541) target = $region52
      $region51: #{conv2d_weight_modulate.1} parent=47 // pred_region
        %s1544 = smul.u32 8, %s23
        %p1545 = scmp.lt.s32.totalorder %s22, 1
        %s1546 = scalar_select %p1545, %s22, 1
        %p1547 = scmp.lt.s32.totalorder %s1544, 15
        %s1548 = scalar_select %p1547, %s1544, 15
        %s1549 = smul.addr %s1548, 2
        %s1550 = smul.addr %s1546, 32
        %s1551 = sadd.s32 %s1549, %s1550
        %s1552 = smul.addr %s1551, 8
        %s1553 = scalar_lea.vmem %s5, %s1552
      $region52: #{conv2d_weight_modulate.1} parent=47 // pred_fallthru
        _
    $region48: #{conv2d_weight_modulate.1} parent=5 // pred_fallthru
      _
  $region6: #{conv2d_weight_modulate.1} parent=0 // loop_footer
    %s15 = sadd.s32 1, %s11
  $region7: #{conv2d_weight_modulate.1} parent=0 // loop_footer_branch
    %10 = sbr.rel target = $region3
  $region8: #{conv2d_weight_modulate.1} parent=0 // loop_exit
    _

</llo_original>
